<compile_context>
chip_gen: v5e
topology: v5e:2x2
jax: 0.10.0
libtpu: 0.0.40
codegen_flags: <defaults>
</compile_context>

<pallas_src>
import jax
import jax.numpy as jnp
from jax.experimental import pallas as pl
from jax.experimental.pallas import tpu as pltpu

EPS = 1e-5
LANE = 128
TILE_ROWS = 256                      # lane-aligned row tiles (review: 256-512 beats 128)
VMEM_LIMIT = 32 * 1024 * 1024        # safe on v5e/v6e (128 MiB) and v7x (64 MiB)


def _round_up(v, m):
    return ((v + m - 1) // m) * m


def _pad2d(a, rows, cols):
    r, c = a.shape
    return jnp.pad(a, ((0, rows - r), (0, cols - c)))


# ----------------------------------------------------------------------------
# Kernel 1 (fused): atom chain + weave gather
#   per N-row tile:
#     h   = x
#     for each layer: h = relu(h @ Wa + ba) * scale + shift      (BN folded)
#     hg  = h @ Wg + bg
#     acc[G_pad, Dout] += onehot(batch_tile) @ hg                (segment sum)
#   last step: out = acc * (1 / count)
# ----------------------------------------------------------------------------
def _make_atom_gather_kernel(num_layers):
    def kernel(*refs):
        batch_ref, x_ref = refs[0], refs[1]
        o_ref = refs[-1]

        idx = 2
        h = x_ref[...]                                        # bf16 (TILE, Din)
        for _ in range(num_layers):
            wa, ba, sa, sh = refs[idx], refs[idx + 1], refs[idx + 2], refs[idx + 3]
            idx += 4
            z = jnp.dot(h, wa[...], preferred_element_type=jnp.float32) + ba[...]
            z = jnp.maximum(z, 0.0) * sa[...] + sh[...]       # relu -> folded BN
            h = z.astype(jnp.bfloat16)
        wg, bg, invc = refs[idx], refs[idx + 1], refs[idx + 2]

        hg = jnp.dot(h, wg[...], preferred_element_type=jnp.float32) + bg[...]

        @pl.when(pl.program_id(0) == 0)
        def _():
            o_ref[...] = jnp.zeros_like(o_ref)

        g = o_ref.shape[0]
        batch = batch_ref[...]                                # (1, TILE) int32
        seg = jax.lax.broadcasted_iota(jnp.int32, (g, batch.shape[1]), 0)
        onehot = (seg == batch).astype(jnp.bfloat16)          # exact 0/1 in bf16
        o_ref[...] += jnp.dot(onehot, hg.astype(jnp.bfloat16),
                              preferred_element_type=jnp.float32)

        @pl.when(pl.program_id(0) == pl.num_programs(0) - 1)
        def _():
            o_ref[...] = o_ref[...] * invc[...]

    return kernel


def fused_atom_gather(xp, batch2d, layer_params, wg, bg, inv_counts, *,
                      tile_rows=TILE_ROWS):
    n, din0 = xp.shape
    assert n % tile_rows == 0, "rows must be padded to the row tile"
    nt = n // tile_rows
    g_pad = inv_counts.shape[0]
    dout = wg.shape[1]
    fix = lambda i: (0, 0)

    args = [batch2d, xp]
    in_specs = [pl.BlockSpec((1, tile_rows), lambda i: (0, i)),
                pl.BlockSpec((tile_rows, din0), lambda i: (i, 0))]
    flops, bytes_acc = 0, 2 * n * din0 + 4 * n
    din = din0
    for lp in layer_params:
        da = lp["wa"].shape[1]
        args += [lp["wa"], lp["ba"], lp["sa"], lp["ha"]]
        in_specs += [pl.BlockSpec((din, da), fix),
                     pl.BlockSpec((1, da), fix),
                     pl.BlockSpec((1, da), fix),
                     pl.BlockSpec((1, da), fix)]
        flops += 2 * n * din * da
        bytes_acc += 2 * din * da + 3 * 4 * da
        din = da
    args += [wg, bg, inv_counts]
    in_specs += [pl.BlockSpec((din, dout), fix),
                 pl.BlockSpec((1, dout), fix),
                 pl.BlockSpec((g_pad, 1), fix)]
    flops += 2 * n * din * dout + 2 * n * g_pad * dout
    bytes_acc += 2 * din * dout + 4 * dout + 4 * g_pad * (dout + 1)

    return pl.pallas_call(
        _make_atom_gather_kernel(len(layer_params)),
        out_shape=jax.ShapeDtypeStruct((g_pad, dout), jnp.float32),
        grid=(nt,),
        in_specs=in_specs,
        out_specs=pl.BlockSpec((g_pad, dout), fix),   # resident accumulator
        compiler_params=pltpu.CompilerParams(
            dimension_semantics=("arbitrary",),       # reduction over row tiles
            vmem_limit_bytes=VMEM_LIMIT),
        cost_estimate=pl.CostEstimate(flops=int(flops), transcendentals=0,
                                      bytes_accessed=int(bytes_acc)),
    )(*args)


# ----------------------------------------------------------------------------
# Kernel 2: pair update (AlternateWeaveLayer pair branch)
#   out = send @ Ws + recv @ Wr + relu(pf @ Wp + bp) * scale + (shift + bap)
# ----------------------------------------------------------------------------
def _pair_kernel(send_ref, recv_ref, pf_ref, ws_ref, wr_ref,
                 wp_ref, bp_ref, sp_ref, shp_ref, o_ref):
    hp = jnp.dot(pf_ref[...], wp_ref[...], preferred_element_type=jnp.float32) + bp_ref[...]
    hp = jnp.maximum(hp, 0.0) * sp_ref[...] + shp_ref[...]      # bap folded into shp
    a2p = (jnp.dot(send_ref[...], ws_ref[...], preferred_element_type=jnp.float32)
           + jnp.dot(recv_ref[...], wr_ref[...], preferred_element_type=jnp.float32))
    o_ref[...] = (a2p + hp).astype(o_ref.dtype)


def pair_update(send, recv, pf, lp, *, tile_rows=TILE_ROWS):
    p, din = send.shape
    dpin = lp["wp"].shape[0]
    dout = lp["wp"].shape[1]
    assert p % tile_rows == 0, "pair rows must be padded to the row tile"
    pt = p // tile_rows
    row = lambda i: (i, 0)
    fix = lambda i: (0, 0)
    flops = 2 * p * (dpin + 2 * din) * dout
    bytes_acc = 2 * p * (2 * din + dpin + dout) + 2 * (2 * din + dpin) * dout + 3 * 4 * dout
    return pl.pallas_call(
        _pair_kernel,
        out_shape=jax.ShapeDtypeStruct((p, dout), jnp.bfloat16),   # bf16 intermediate
        grid=(pt,),
        in_specs=[pl.BlockSpec((tile_rows, din), row),
                  pl.BlockSpec((tile_rows, din), row),
                  pl.BlockSpec((tile_rows, dpin), row),
                  pl.BlockSpec((din, dout), fix),
                  pl.BlockSpec((din, dout), fix),
                  pl.BlockSpec((dpin, dout), fix),
                  pl.BlockSpec((1, dout), fix),
                  pl.BlockSpec((1, dout), fix),
                  pl.BlockSpec((1, dout), fix)],
        out_specs=pl.BlockSpec((tile_rows, dout), row),
        compiler_params=pltpu.CompilerParams(
            dimension_semantics=("parallel",),
            vmem_limit_bytes=VMEM_LIMIT),
        cost_estimate=pl.CostEstimate(flops=int(flops), transcendentals=0,
                                      bytes_accessed=int(bytes_acc)),
    )(send, recv, pf, lp["was"], lp["war"], lp["wp"], lp["bp"], lp["sp"], lp["shp"])


def pair_update_layer(x, pf, pair_index, lp, *, out_dim, tile_rows=TILE_ROWS):
    """AlternateWeaveLayer pair branch on logical (unpadded) tensors."""
    p = pf.shape[0]
    p_pad = _round_up(p, tile_rows)
    din = lp["was"].shape[0]
    dpin = lp["wp"].shape[0]
    xp = _pad2d(x.astype(jnp.float32), x.shape[0], din).astype(jnp.bfloat16)
    # TODO(synk): data-dependent row gather x[pair_index] stays as XLA glue (see header note).
    send = jnp.pad(xp[pair_index[0]], ((0, p_pad - p), (0, 0)))
    recv = jnp.pad(xp[pair_index[1]], ((0, p_pad - p), (0, 0)))
    pfp = _pad2d(pf.astype(jnp.float32), p_pad, dpin).astype(jnp.bfloat16)
    out = pair_update(send, recv, pfp, lp, tile_rows=tile_rows)
    return out[:p, :out_dim]


# ----------------------------------------------------------------------------
# Parameter init (raw, PyTorch-like) and prepare (fold BN + bap, split wap, pad, bf16)
# ----------------------------------------------------------------------------
def init_linear(key, in_dim, out_dim):
    kw, kb = jax.random.split(key)
    w = jax.random.normal(kw, (in_dim, out_dim), jnp.float32) * 0.1
    b = jax.random.normal(kb, (1, out_dim), jnp.float32) * 0.1
    return w, b


def init_weave_layer(key, atom_in, pair_in, atom_out, pair_out):
    k1, k2, k3 = jax.random.split(key, 3)
    wa, ba = init_linear(k1, atom_in, atom_out)
    wp, bp = init_linear(k2, pair_in, pair_out)
    wap, bap = init_linear(k3, 2 * atom_in, pair_out)
    return {
        "wa": wa, "ba": ba,
        "ga": jnp.ones((1, atom_out), jnp.float32), "bta": jnp.zeros((1, atom_out), jnp.float32),
        "ma": jnp.zeros((1, atom_out), jnp.float32), "va": jnp.ones((1, atom_out), jnp.float32),
        "wp": wp, "bp": bp,
        "gp": jnp.ones((1, pair_out), jnp.float32), "btp": jnp.zeros((1, pair_out), jnp.float32),
        "mp": jnp.zeros((1, pair_out), jnp.float32), "vp": jnp.ones((1, pair_out), jnp.float32),
        "wap": wap, "bap": bap,
    }


def _fold_bn(gamma, beta, mean, var):
    scale = gamma / jnp.sqrt(var + EPS)
    shift = beta - mean * scale
    return scale, shift


def prepare_weave_layer(raw, atom_in, pair_in):
    atom_out = raw["wa"].shape[1]
    pair_out = raw["wp"].shape[1]
    din, dpin = _round_up(atom_in, LANE), _round_up(pair_in, LANE)
    da, dp = _round_up(atom_out, LANE), _round_up(pair_out, LANE)
    sa, ha = _fold_bn(raw["ga"], raw["bta"], raw["ma"], raw["va"])
    sp, hp = _fold_bn(raw["gp"], raw["btp"], raw["mp"], raw["vp"])
    shp = hp + raw["bap"]                       # fold atom_to_pair bias into pair shift
    wap_s, wap_r = raw["wap"][:atom_in], raw["wap"][atom_in:]
    return {
        "wa": _pad2d(raw["wa"], din, da).astype(jnp.bfloat16),
        "ba": _pad2d(raw["ba"], 1, da),
        "sa": _pad2d(sa, 1, da),
        "ha": _pad2d(ha, 1, da),
        "wp": _pad2d(raw["wp"], dpin, dp).astype(jnp.bfloat16),
        "bp": _pad2d(raw["bp"], 1, dp),
        "sp": _pad2d(sp, 1, dp),
        "shp": _pad2d(shp, 1, dp),
        "was": _pad2d(wap_s, din, dp).astype(jnp.bfloat16),
        "war": _pad2d(wap_r, din, dp).astype(jnp.bfloat16),
    }


def prepare_gather(raw, in_dim):
    out_dim = raw["w"].shape[1]
    din, dout = _round_up(in_dim, LANE), _round_up(out_dim, LANE)
    return {"w": _pad2d(raw["w"], din, dout).astype(jnp.bfloat16),
            "b": _pad2d(raw["b"], 1, dout)}


def prepare_params(raw_params, atom_in, pair_in):
    layers = []
    a_in, p_in = atom_in, pair_in
    for lr in raw_params["weave_layers"]:
        layers.append(prepare_weave_layer(lr, a_in, p_in))
        a_in, p_in = lr["wa"].shape[1], lr["wp"].shape[1]
    return {"weave_layers": layers, "gather": prepare_gather(raw_params["gather"], a_in)}


# ----------------------------------------------------------------------------
# Sequential graph forward (mirrors AlternateSequentialWeaveGraph.forward)
# ----------------------------------------------------------------------------
def sequential_weave_graph_forward(x, pair_features, pair_index, batch, params, *,
                                   num_graphs, out_dim, tile_rows=TILE_ROWS):
    """Returns scatter_mean(linear(atom_chain(x)), batch) — identical to the module's output.

    NOTE: in AlternateSequentialWeaveGraph the returned value depends only on the atom path
    (atom_transform never reads pair features), so the pair branch is elided here (perf
    review: every pair_update is dead w.r.t. the gather output).  The pair branch kernel is
    `pair_update_layer` and is validated separately in __main__.
    """
    del pair_features, pair_index  # dead w.r.t. the module's returned value
    assert tile_rows % 128 == 0
    layers = params["weave_layers"]
    gat = params["gather"]

    n = x.shape[0]
    n_pad = _round_up(n, tile_rows)
    g_pad = _round_up(max(num_graphs, 8), 8)

    din0 = layers[0]["wa"].shape[0]
    xp = _pad2d(x.astype(jnp.float32), n_pad, din0).astype(jnp.bfloat16)
    # sentinel id for padded atoms -> never matches a real segment in the gather
    batch2d = jnp.pad(batch.astype(jnp.int32), (0, n_pad - n),
                      constant_values=g_pad).reshape(1, n_pad)

    counts = jax.ops.segment_sum(jnp.ones((n,), jnp.float32), batch.astype(jnp.int32),
                                 num_segments=num_graphs)
    counts = jnp.pad(counts, (0, g_pad - num_graphs))
    inv_counts = (1.0 / jnp.maximum(counts, 1.0)).reshape(g_pad, 1)

    out = fused_atom_gather(xp, batch2d, layers, gat["w"], gat["b"], inv_counts,
                            tile_rows=tile_rows)
    return out[:num_graphs, :out_dim]


# ----------------------------------------------------------------------------
# Pure-JAX f32 references (use raw, unfolded, unpadded params)
# ----------------------------------------------------------------------------
def ref_forward(x, pf, pair_index, batch, raw_params, num_graphs):
    for p in raw_params["weave_layers"]:
        send = x[pair_index[0]]
        recv = x[pair_index[1]]
        h = jnp.maximum(x @ p["wa"] + p["ba"], 0.0)
        h = (h - p["ma"]) / jnp.sqrt(p["va"] + EPS) * p["ga"] + p["bta"]
        hp = jnp.maximum(pf @ p["wp"] + p["bp"], 0.0)
        hp = (hp - p["mp"]) / jnp.sqrt(p["vp"] + EPS) * p["gp"] + p["btp"]
        a2p = jnp.concatenate([send, recv], axis=-1) @ p["wap"] + p["bap"]
        x, pf = h, a2p + hp
    g = raw_params["gather"]
    h = x @ g["w"] + g["b"]
    sums = jax.ops.segment_sum(h, batch, num_segments=num_graphs)
    counts = jax.ops.segment_sum(jnp.ones((x.shape[0], 1), jnp.float32), batch,
                                 num_segments=num_graphs)
    return sums / jnp.maximum(counts, 1.0)


def ref_pair_layer(x, pf, pair_index, p):
    send = x[pair_index[0]]
    recv = x[pair_index[1]]
    hp = jnp.maximum(pf @ p["wp"] + p["bp"], 0.0)
    hp = (hp - p["mp"]) / jnp.sqrt(p["vp"] + EPS) * p["gp"] + p["btp"]
    return jnp.concatenate([send, recv], axis=-1) @ p["wap"] + p["bap"] + hp


if __name__ == "__main__":
    key = jax.random.PRNGKey(0)
    k_x, k_pf, k_pi, k_l1, k_l2, k_g = jax.random.split(key, 6)

    # small multi-tile graph batch: 300 atoms, 720 directed pairs, 4 graphs
    N, P, G = 300, 720, 4
    atom_in, pair_in = 8, 8
    atom_hid, pair_hid = 16, 16
    gather_out = 32

    x = jax.random.normal(k_x, (N, atom_in), jnp.float32)
    pair_features = jax.random.normal(k_pf, (P, pair_in), jnp.float32)
    pair_index = jax.random.randint(k_pi, (2, P), 0, N, dtype=jnp.int32)
    batch = jnp.repeat(jnp.arange(G, dtype=jnp.int32), N // G)

    raw_params = {
        "weave_layers": [
            init_weave_layer(k_l1, atom_in, pair_in, atom_hid, pair_hid),
            init_weave_layer(k_l2, atom_hid, pair_hid, atom_hid, pair_hid),
        ],
        "gather": dict(zip(("w", "b"), init_linear(k_g, atom_hid, gather_out))),
    }
    params = prepare_params(raw_params, atom_in, pair_in)

    fwd = jax.jit(sequential_weave_graph_forward,
                  static_argnames=("num_graphs", "out_dim", "tile_rows"))
    out = fwd(x, pair_features, pair_index, batch, params,
              num_graphs=G, out_dim=gather_out)
    out = jax.block_until_ready(out)

    ref = ref_forward(x, pair_features, pair_index, batch, raw_params, G)
    assert out.shape == (G, gather_out)
    # bf16 MXU operands / bf16 gather accumulate vs f32 reference -> relaxed tolerance
    assert jnp.allclose(out, ref, atol=2e-2, rtol=2e-2), "graph output mismatch vs reference"

    # Also validate the pair-update kernel (dead w.r.t. the module's returned value).
    pair_out = pair_update_layer(x, pair_features, pair_index,
                                 params["weave_layers"][0], out_dim=pair_hid)
    pair_out = jax.block_until_ready(pair_out)
    pair_ref = ref_pair_layer(x, pair_features, pair_index, raw_params["weave_layers"][0])
    assert pair_out.shape == (P, pair_hid)
    assert jnp.allclose(pair_out.astype(jnp.float32), pair_ref, atol=3e-2, rtol=3e-2), \
        "pair update mismatch vs reference"

    print("KERNEL_OK")
</pallas_src>

<mosaic_0001>
module attributes {stable_mosaic.version = 11 : i64} {
  func.func @kernel(%arg0: i32, %arg1: memref<1x256xi32, #tpu.memory_space<vmem>>, %arg2: memref<256x128xbf16, #tpu.memory_space<vmem>>, %arg3: memref<128x128xbf16, #tpu.memory_space<vmem>>, %arg4: memref<1x128xf32, #tpu.memory_space<vmem>>, %arg5: memref<1x128xf32, #tpu.memory_space<vmem>>, %arg6: memref<1x128xf32, #tpu.memory_space<vmem>>, %arg7: memref<128x128xbf16, #tpu.memory_space<vmem>>, %arg8: memref<1x128xf32, #tpu.memory_space<vmem>>, %arg9: memref<1x128xf32, #tpu.memory_space<vmem>>, %arg10: memref<1x128xf32, #tpu.memory_space<vmem>>, %arg11: memref<128x128xbf16, #tpu.memory_space<vmem>>, %arg12: memref<1x128xf32, #tpu.memory_space<vmem>>, %arg13: memref<8x1xf32, #tpu.memory_space<vmem>>, %arg14: memref<8x128xf32, #tpu.memory_space<vmem>>) attributes {dimension_semantics = [#tpu.dimension_semantics<arbitrary>], iteration_bounds = array<i64: 2>, scalar_prefetch = 0 : i64, scratch_operands = 0 : i64, tpu.core_type = #tpu.core_type<tc>, window_params = [{transform_indices = @transform_0, window_bounds = array<i64: 1, 256>}, {transform_indices = @transform_1, window_bounds = array<i64: 256, 128>}, {pipeline_mode = #tpu.pipeline_mode<synchronous>, transform_indices = @transform_2, window_bounds = array<i64: 128, 128>}, {pipeline_mode = #tpu.pipeline_mode<synchronous>, transform_indices = @transform_3, window_bounds = array<i64: 1, 128>}, {pipeline_mode = #tpu.pipeline_mode<synchronous>, transform_indices = @transform_4, window_bounds = array<i64: 1, 128>}, {pipeline_mode = #tpu.pipeline_mode<synchronous>, transform_indices = @transform_5, window_bounds = array<i64: 1, 128>}, {pipeline_mode = #tpu.pipeline_mode<synchronous>, transform_indices = @transform_6, window_bounds = array<i64: 128, 128>}, {pipeline_mode = #tpu.pipeline_mode<synchronous>, transform_indices = @transform_7, window_bounds = array<i64: 1, 128>}, {pipeline_mode = #tpu.pipeline_mode<synchronous>, transform_indices = @transform_8, window_bounds = array<i64: 1, 128>}, {pipeline_mode = #tpu.pipeline_mode<synchronous>, transform_indices = @transform_9, window_bounds = array<i64: 1, 128>}, {pipeline_mode = #tpu.pipeline_mode<synchronous>, transform_indices = @transform_10, window_bounds = array<i64: 128, 128>}, {pipeline_mode = #tpu.pipeline_mode<synchronous>, transform_indices = @transform_11, window_bounds = array<i64: 1, 128>}, {pipeline_mode = #tpu.pipeline_mode<synchronous>, transform_indices = @transform_12, window_bounds = array<i64: 8, 1>}, {pipeline_mode = #tpu.pipeline_mode<synchronous>, transform_indices = @transform_13, window_bounds = array<i64: 8, 128>}]} {
    %c0 = arith.constant 0 : index
    %c0_0 = arith.constant 0 : index
    %0 = vector.load %arg2[%c0, %c0_0] : memref<256x128xbf16, #tpu.memory_space<vmem>>, vector<256x128xbf16>
    %c0_1 = arith.constant 0 : index
    %c0_2 = arith.constant 0 : index
    %1 = vector.load %arg3[%c0_1, %c0_2] : memref<128x128xbf16, #tpu.memory_space<vmem>>, vector<128x128xbf16>
    %cst = arith.constant dense<0.000000e+00> : vector<256x128xf32>
    %2 = tpu.matmul %0, %1, %cst {dimension_numbers = #tpu.dot_dimension_numbers<[1], [0], [0], [1], [0, 0, 1, 1], [], []>} : vector<256x128xbf16>, vector<128x128xbf16>, vector<256x128xf32> -> vector<256x128xf32>
    %c0_3 = arith.constant 0 : index
    %c0_4 = arith.constant 0 : index
    %3 = vector.load %arg4[%c0_3, %c0_4] : memref<1x128xf32, #tpu.memory_space<vmem>>, vector<1x128xf32>
    %4 = vector.broadcast %3 : vector<1x128xf32> to vector<256x128xf32>
    %5 = arith.addf %2, %4 : vector<256x128xf32>
    %cst_5 = arith.constant 0.000000e+00 : f32
    %6 = vector.broadcast %cst_5 : f32 to vector<256x128xf32>
    %7 = arith.maximumf %5, %6 : vector<256x128xf32>
    %c0_6 = arith.constant 0 : index
    %c0_7 = arith.constant 0 : index
    %8 = vector.load %arg5[%c0_6, %c0_7] : memref<1x128xf32, #tpu.memory_space<vmem>>, vector<1x128xf32>
    %9 = vector.broadcast %8 : vector<1x128xf32> to vector<256x128xf32>
    %10 = arith.mulf %7, %9 : vector<256x128xf32>
    %c0_8 = arith.constant 0 : index
    %c0_9 = arith.constant 0 : index
    %11 = vector.load %arg6[%c0_8, %c0_9] : memref<1x128xf32, #tpu.memory_space<vmem>>, vector<1x128xf32>
    %12 = vector.broadcast %11 : vector<1x128xf32> to vector<256x128xf32>
    %13 = arith.addf %10, %12 : vector<256x128xf32>
    %14 = arith.truncf %13 : vector<256x128xf32> to vector<256x128xbf16>
    %c0_10 = arith.constant 0 : index
    %c0_11 = arith.constant 0 : index
    %15 = vector.load %arg7[%c0_10, %c0_11] : memref<128x128xbf16, #tpu.memory_space<vmem>>, vector<128x128xbf16>
    %cst_12 = arith.constant dense<0.000000e+00> : vector<256x128xf32>
    %16 = tpu.matmul %14, %15, %cst_12 {dimension_numbers = #tpu.dot_dimension_numbers<[1], [0], [0], [1], [0, 0, 1, 1], [], []>} : vector<256x128xbf16>, vector<128x128xbf16>, vector<256x128xf32> -> vector<256x128xf32>
    %c0_13 = arith.constant 0 : index
    %c0_14 = arith.constant 0 : index
    %17 = vector.load %arg8[%c0_13, %c0_14] : memref<1x128xf32, #tpu.memory_space<vmem>>, vector<1x128xf32>
    %18 = vector.broadcast %17 : vector<1x128xf32> to vector<256x128xf32>
    %19 = arith.addf %16, %18 : vector<256x128xf32>
    %cst_15 = arith.constant 0.000000e+00 : f32
    %20 = vector.broadcast %cst_15 : f32 to vector<256x128xf32>
    %21 = arith.maximumf %19, %20 : vector<256x128xf32>
    %c0_16 = arith.constant 0 : index
    %c0_17 = arith.constant 0 : index
    %22 = vector.load %arg9[%c0_16, %c0_17] : memref<1x128xf32, #tpu.memory_space<vmem>>, vector<1x128xf32>
    %23 = vector.broadcast %22 : vector<1x128xf32> to vector<256x128xf32>
    %24 = arith.mulf %21, %23 : vector<256x128xf32>
    %c0_18 = arith.constant 0 : index
    %c0_19 = arith.constant 0 : index
    %25 = vector.load %arg10[%c0_18, %c0_19] : memref<1x128xf32, #tpu.memory_space<vmem>>, vector<1x128xf32>
    %26 = vector.broadcast %25 : vector<1x128xf32> to vector<256x128xf32>
    %27 = arith.addf %24, %26 : vector<256x128xf32>
    %28 = arith.truncf %27 : vector<256x128xf32> to vector<256x128xbf16>
    %c0_20 = arith.constant 0 : index
    %c0_21 = arith.constant 0 : index
    %29 = vector.load %arg11[%c0_20, %c0_21] : memref<128x128xbf16, #tpu.memory_space<vmem>>, vector<128x128xbf16>
    %cst_22 = arith.constant dense<0.000000e+00> : vector<256x128xf32>
    %30 = tpu.matmul %28, %29, %cst_22 {dimension_numbers = #tpu.dot_dimension_numbers<[1], [0], [0], [1], [0, 0, 1, 1], [], []>} : vector<256x128xbf16>, vector<128x128xbf16>, vector<256x128xf32> -> vector<256x128xf32>
    %c0_23 = arith.constant 0 : index
    %c0_24 = arith.constant 0 : index
    %31 = vector.load %arg12[%c0_23, %c0_24] : memref<1x128xf32, #tpu.memory_space<vmem>>, vector<1x128xf32>
    %32 = vector.broadcast %31 : vector<1x128xf32> to vector<256x128xf32>
    %33 = arith.addf %30, %32 : vector<256x128xf32>
    %c0_i32 = arith.constant 0 : i32
    %34 = arith.cmpi eq, %arg0, %c0_i32 : i32
    %35 = arith.extui %34 : i1 to i32
    %c0_i32_25 = arith.constant 0 : i32
    %36 = arith.cmpi ne, %35, %c0_i32_25 : i32
    scf.if %36 {
      %cst_34 = arith.constant 0.000000e+00 : f32
      %52 = vector.broadcast %cst_34 : f32 to vector<8x128xf32>
      %c0_35 = arith.constant 0 : index
      %c0_36 = arith.constant 0 : index
      %53 = vector.load %arg14[%c0_35, %c0_36] : memref<8x128xf32, #tpu.memory_space<vmem>>, vector<8x128xf32>
      tpu.vector_store %arg14[%c0_35, %c0_36], %52 {strides = array<i32>} : memref<8x128xf32, #tpu.memory_space<vmem>>, vector<8x128xf32>,
    } else {
    }
    %c0_26 = arith.constant 0 : index
    %c0_27 = arith.constant 0 : index
    %37 = vector.load %arg1[%c0_26, %c0_27] : memref<1x256xi32, #tpu.memory_space<vmem>>, vector<1x256xi32>
    %38 = tpu.iota {dimensions = array<i32: 0>} : vector<8x256xi32>
    %39 = vector.broadcast %37 : vector<1x256xi32> to vector<8x256xi32>
    %40 = arith.cmpi eq, %38, %39 : vector<8x256xi32>
    %41 = arith.extui %40 : vector<8x256xi1> to vector<8x256xi32>
    %42 = arith.sitofp %41 : vector<8x256xi32> to vector<8x256xf32>
    %43 = arith.truncf %42 : vector<8x256xf32> to vector<8x256xbf16>
    %c0_28 = arith.constant 0 : index
    %c0_29 = arith.constant 0 : index
    %44 = vector.load %arg14[%c0_28, %c0_29] : memref<8x128xf32, #tpu.memory_space<vmem>>, vector<8x128xf32>
    %45 = arith.truncf %33 : vector<256x128xf32> to vector<256x128xbf16>
    %cst_30 = arith.constant dense<0.000000e+00> : vector<8x128xf32>
    %46 = tpu.matmul %43, %45, %cst_30 {dimension_numbers = #tpu.dot_dimension_numbers<[1], [0], [0], [1], [0, 0, 1, 1], [], []>} : vector<8x256xbf16>, vector<256x128xbf16>, vector<8x128xf32> -> vector<8x128xf32>
    %47 = arith.addf %44, %46 : vector<8x128xf32>
    %c0_31 = arith.constant 0 : index
    %c0_32 = arith.constant 0 : index
    %48 = vector.load %arg14[%c0_31, %c0_32] : memref<8x128xf32, #tpu.memory_space<vmem>>, vector<8x128xf32>
    tpu.vector_store %arg14[%c0_31, %c0_32], %47 {strides = array<i32>} : memref<8x128xf32, #tpu.memory_space<vmem>>, vector<8x128xf32>,
    %c1_i32 = arith.constant 1 : i32
    %49 = arith.cmpi eq, %arg0, %c1_i32 : i32
    %50 = arith.extui %49 : i1 to i32
    %c0_i32_33 = arith.constant 0 : i32
    %51 = arith.cmpi ne, %50, %c0_i32_33 : i32
    scf.if %51 {
      %c0_34 = arith.constant 0 : index
      %c0_35 = arith.constant 0 : index
      %52 = vector.load %arg14[%c0_34, %c0_35] : memref<8x128xf32, #tpu.memory_space<vmem>>, vector<8x128xf32>
      %c0_36 = arith.constant 0 : index
      %c0_37 = arith.constant 0 : index
      %53 = vector.load %arg13[%c0_36, %c0_37] : memref<8x1xf32, #tpu.memory_space<vmem>>, vector<8x1xf32>
      %54 = vector.broadcast %53 : vector<8x1xf32> to vector<8x128xf32>
      %55 = arith.mulf %52, %54 : vector<8x128xf32>
      %c0_38 = arith.constant 0 : index
      %c0_39 = arith.constant 0 : index
      %56 = vector.load %arg14[%c0_38, %c0_39] : memref<8x128xf32, #tpu.memory_space<vmem>>, vector<8x128xf32>
      tpu.vector_store %arg14[%c0_38, %c0_39], %55 {strides = array<i32>} : memref<8x128xf32, #tpu.memory_space<vmem>>, vector<8x128xf32>,
    } else {
    }
    return
  }
  func.func @transform_0(%arg0: i32) -> (i32, i32) {
    %c0_i32 = arith.constant 0 : i32
    %c0_i32_0 = arith.constant 0 : i32
    return %c0_i32, %arg0 : i32, i32
  }
  func.func @transform_1(%arg0: i32) -> (i32, i32) {
    %c0_i32 = arith.constant 0 : i32
    %c0_i32_0 = arith.constant 0 : i32
    return %arg0, %c0_i32 : i32, i32
  }
  func.func @transform_2(%arg0: i32) -> (i32, i32) {
    %c0_i32 = arith.constant 0 : i32
    %c0_i32_0 = arith.constant 0 : i32
    %c0_i32_1 = arith.constant 0 : i32
    return %c0_i32, %c0_i32_0 : i32, i32
  }
  func.func @transform_3(%arg0: i32) -> (i32, i32) {
    %c0_i32 = arith.constant 0 : i32
    %c0_i32_0 = arith.constant 0 : i32
    %c0_i32_1 = arith.constant 0 : i32
    return %c0_i32, %c0_i32_0 : i32, i32
  }
  func.func @transform_4(%arg0: i32) -> (i32, i32) {
    %c0_i32 = arith.constant 0 : i32
    %c0_i32_0 = arith.constant 0 : i32
    %c0_i32_1 = arith.constant 0 : i32
    return %c0_i32, %c0_i32_0 : i32, i32
  }
  func.func @transform_5(%arg0: i32) -> (i32, i32) {
    %c0_i32 = arith.constant 0 : i32
    %c0_i32_0 = arith.constant 0 : i32
    %c0_i32_1 = arith.constant 0 : i32
    return %c0_i32, %c0_i32_0 : i32, i32
  }
  func.func @transform_6(%arg0: i32) -> (i32, i32) {
    %c0_i32 = arith.constant 0 : i32
    %c0_i32_0 = arith.constant 0 : i32
    %c0_i32_1 = arith.constant 0 : i32
    return %c0_i32, %c0_i32_0 : i32, i32
  }
  func.func @transform_7(%arg0: i32) -> (i32, i32) {
    %c0_i32 = arith.constant 0 : i32
    %c0_i32_0 = arith.constant 0 : i32
    %c0_i32_1 = arith.constant 0 : i32
    return %c0_i32, %c0_i32_0 : i32, i32
  }
  func.func @transform_8(%arg0: i32) -> (i32, i32) {
    %c0_i32 = arith.constant 0 : i32
    %c0_i32_0 = arith.constant 0 : i32
    %c0_i32_1 = arith.constant 0 : i32
    return %c0_i32, %c0_i32_0 : i32, i32
  }
  func.func @transform_9(%arg0: i32) -> (i32, i32) {
    %c0_i32 = arith.constant 0 : i32
    %c0_i32_0 = arith.constant 0 : i32
    %c0_i32_1 = arith.constant 0 : i32
    return %c0_i32, %c0_i32_0 : i32, i32
  }
  func.func @transform_10(%arg0: i32) -> (i32, i32) {
    %c0_i32 = arith.constant 0 : i32
    %c0_i32_0 = arith.constant 0 : i32
    %c0_i32_1 = arith.constant 0 : i32
    return %c0_i32, %c0_i32_0 : i32, i32
  }
  func.func @transform_11(%arg0: i32) -> (i32, i32) {
    %c0_i32 = arith.constant 0 : i32
    %c0_i32_0 = arith.constant 0 : i32
    %c0_i32_1 = arith.constant 0 : i32
    return %c0_i32, %c0_i32_0 : i32, i32
  }
  func.func @transform_12(%arg0: i32) -> (i32, i32) {
    %c0_i32 = arith.constant 0 : i32
    %c0_i32_0 = arith.constant 0 : i32
    %c0_i32_1 = arith.constant 0 : i32
    return %c0_i32, %c0_i32_0 : i32, i32
  }
  func.func @transform_13(%arg0: i32) -> (i32, i32) {
    %c0_i32 = arith.constant 0 : i32
    %c0_i32_0 = arith.constant 0 : i32
    %c0_i32_1 = arith.constant 0 : i32
    return %c0_i32, %c0_i32_0 : i32, i32
  }
}

</mosaic_0001>

<llo_original>
// kernel: sequential_weave_graph_forward.1
$region0: #{sequential_weave_graph_forward.1}
  #allocation0 [shape = 'u32[]', space=smem, size = 0x4, offset = 0x4, fixed_abs, tag = 'smem constant byte address 0x4 - core index']
  #allocation1 [shape = 'u32[72,128]{1,0:T(1,128)}', space=vmem, size = 0x9000, scoped, tag = 'internal scratch']
  %s0 = inlined_call_operand.vmem [shape: s32[1,512], index: 0, kind: input, shape index: {}]
  %s1 = inlined_call_operand.vmem [shape: bf16[512,128], index: 1, kind: input, shape index: {}]
  %s2 = inlined_call_operand.vmem [shape: bf16[128,128], index: 2, kind: input, shape index: {}]
  %s3 = inlined_call_operand.vmem [shape: f32[1,128], index: 3, kind: input, shape index: {}]
  %s4 = inlined_call_operand.vmem [shape: f32[1,128], index: 4, kind: input, shape index: {}]
  %s5 = inlined_call_operand.vmem [shape: f32[1,128], index: 5, kind: input, shape index: {}]
  %s6 = inlined_call_operand.vmem [shape: bf16[128,128], index: 6, kind: input, shape index: {}]
  %s7 = inlined_call_operand.vmem [shape: f32[1,128], index: 7, kind: input, shape index: {}]
  %s8 = inlined_call_operand.vmem [shape: f32[1,128], index: 8, kind: input, shape index: {}]
  %s9 = inlined_call_operand.vmem [shape: f32[1,128], index: 9, kind: input, shape index: {}]
  %s10 = inlined_call_operand.vmem [shape: bf16[128,128], index: 10, kind: input, shape index: {}]
  %s11 = inlined_call_operand.vmem [shape: f32[1,128], index: 11, kind: input, shape index: {}]
  %s12 = inlined_call_operand.vmem [shape: f32[8,1], index: 12, kind: input, shape index: {}]
  %s13 = inlined_call_operand.vmem [shape: f32[8,128], index: 13, kind: output, shape index: {}]
  %s14 = sld [smem:[#allocation0]]
  $region93: #{sequential_weave_graph_forward.1} parent=0
    _
  %s16 = ssub.s32 1, %s14
  %s17 = scalar_select 0, %s16, %s14
  loop: start=0, step=1, limit=4
  $region2: #{sequential_weave_graph_forward.1} parent=0 // loop_pre_header
    _
  $region3: #{sequential_weave_graph_forward.1} parent=0 // loop_header
    %s19 = sphi 0, %s23
    %p20 = scmp.ge.s32.totalorder %s19, 4
    %s29 = sphi 0, %s31
    %s32 = sphi 0, %s29
    %s33 = sphi 0, %s32
    %s49 = sphi 0, %s33
    %s55 = sphi 0, %s57
    %s58 = sphi 0, %s55
    %s59 = sphi 0, %s58
    %s75 = sphi 0, %s59
    %s79 = sphi 0, %s79
    %s81 = sphi 0, %s79
    %s82 = sphi 0, %s81
    %s96 = sphi 0, %s82
    %s100 = sphi 0, %s100
    %s102 = sphi 0, %s100
    %s103 = sphi 0, %s102
    %s117 = sphi 0, %s103
    %s121 = sphi 0, %s121
    %s123 = sphi 0, %s121
    %s124 = sphi 0, %s123
    %s138 = sphi 0, %s124
    %s142 = sphi 0, %s142
    %s144 = sphi 0, %s142
    %s145 = sphi 0, %s144
    %s159 = sphi 0, %s145
    %s163 = sphi 0, %s163
    %s165 = sphi 0, %s163
    %s166 = sphi 0, %s165
    %s180 = sphi 0, %s166
    %s184 = sphi 0, %s184
    %s186 = sphi 0, %s184
    %s187 = sphi 0, %s186
    %s201 = sphi 0, %s187
    %s205 = sphi 0, %s205
    %s207 = sphi 0, %s205
    %s208 = sphi 0, %s207
    %s222 = sphi 0, %s208
    %s226 = sphi 0, %s226
    %s228 = sphi 0, %s226
    %s229 = sphi 0, %s228
    %s243 = sphi 0, %s229
    %s247 = sphi 0, %s247
    %s249 = sphi 0, %s247
    %s250 = sphi 0, %s249
    %s264 = sphi 0, %s250
    %s268 = sphi 0, %s268
    %s270 = sphi 0, %s268
    %s271 = sphi 0, %s270
    %s285 = sphi 0, %s271
    %s289 = sphi 0, %s289
    %s291 = sphi 0, %s289
    %s292 = sphi 0, %s291
    %s306 = sphi 0, %s292
    %s310 = sphi 0, %s310
    %s312 = sphi 0, %s310
    %s313 = sphi 0, %s312
    %s327 = sphi 0, %s313
  $region4: #{sequential_weave_graph_forward.1} parent=0 // loop_header_branch
    %22 = sbr.rel (%p20) target = $region8
  $region5: #{sequential_weave_graph_forward.1} parent=0 // loop_body
    %s24 = ssub.s32 %s19, 1
    %s25 = ssub.s32 %s19, 2
    %s26 = sadd.s32 %s19, 1
    %s27 = ssub.s32 %s19, %s26
    %p28 = scmp.eq.s32.totalorder %s27, 0
    %s30 = sadd.s32 %s29, 1
    %s31 = scalar_select %p28, %s29, %s30
    %p34 = pneg %p28
    %p35 = scmp.eq.s32.totalorder %s19, 1
    %p36 = por %p34, %p35
    %p37 = scmp.ne.s32.totalorder %s29, %s32
    %p38 = scmp.eq.s32.totalorder %s19, 0
    %p39 = por %p37, %p38
    %p40 = scmp.ne.s32.totalorder %s29, %s32
    %p41 = scmp.eq.s32.totalorder %s24, 1
    %p42 = por %p40, %p41
    %p43 = scmp.ne.s32.totalorder %s32, %s33
    %p44 = scmp.eq.s32.totalorder %s24, 0
    %p45 = por %p43, %p44
    %p46 = scmp.ne.s32.totalorder %s32, %s33
    %p47 = scmp.eq.s32.totalorder %s25, 1
    %p48 = por %p46, %p47
    %p50 = scmp.ne.s32.totalorder %s33, %s49
    %p51 = scmp.eq.s32.totalorder %s25, 0
    %p52 = por %p50, %p51
    %s53 = ssub.s32 %s19, %s26
    %p54 = scmp.eq.s32.totalorder %s53, 0
    %s56 = sadd.s32 %s55, 1
    %s57 = scalar_select %p54, %s55, %s56
    %p60 = pneg %p54
    %p61 = scmp.eq.s32.totalorder %s19, 1
    %p62 = por %p60, %p61
    %p63 = scmp.ne.s32.totalorder %s55, %s58
    %p64 = scmp.eq.s32.totalorder %s19, 0
    %p65 = por %p63, %p64
    %p66 = scmp.ne.s32.totalorder %s55, %s58
    %p67 = scmp.eq.s32.totalorder %s24, 1
    %p68 = por %p66, %p67
    %p69 = scmp.ne.s32.totalorder %s58, %s59
    %p70 = scmp.eq.s32.totalorder %s24, 0
    %p71 = por %p69, %p70
    %p72 = scmp.ne.s32.totalorder %s58, %s59
    %p73 = scmp.eq.s32.totalorder %s25, 1
    %p74 = por %p72, %p73
    %p76 = scmp.ne.s32.totalorder %s59, %s75
    %p77 = scmp.eq.s32.totalorder %s25, 0
    %p78 = por %p76, %p77
    %s80 = sadd.s32 %s79, 1
    %p83 = scmp.eq.s32.totalorder %s19, 1
    %p84 = scmp.ne.s32.totalorder %s79, %s81
    %p85 = scmp.eq.s32.totalorder %s19, 0
    %p86 = por %p84, %p85
    %p87 = scmp.ne.s32.totalorder %s79, %s81
    %p88 = scmp.eq.s32.totalorder %s24, 1
    %p89 = por %p87, %p88
    %p90 = scmp.ne.s32.totalorder %s81, %s82
    %p91 = scmp.eq.s32.totalorder %s24, 0
    %p92 = por %p90, %p91
    %p93 = scmp.ne.s32.totalorder %s81, %s82
    %p94 = scmp.eq.s32.totalorder %s25, 1
    %p95 = por %p93, %p94
    %p97 = scmp.ne.s32.totalorder %s82, %s96
    %p98 = scmp.eq.s32.totalorder %s25, 0
    %p99 = por %p97, %p98
    %s101 = sadd.s32 %s100, 1
    %p104 = scmp.eq.s32.totalorder %s19, 1
    %p105 = scmp.ne.s32.totalorder %s100, %s102
    %p106 = scmp.eq.s32.totalorder %s19, 0
    %p107 = por %p105, %p106
    %p108 = scmp.ne.s32.totalorder %s100, %s102
    %p109 = scmp.eq.s32.totalorder %s24, 1
    %p110 = por %p108, %p109
    %p111 = scmp.ne.s32.totalorder %s102, %s103
    %p112 = scmp.eq.s32.totalorder %s24, 0
    %p113 = por %p111, %p112
    %p114 = scmp.ne.s32.totalorder %s102, %s103
    %p115 = scmp.eq.s32.totalorder %s25, 1
    %p116 = por %p114, %p115
    %p118 = scmp.ne.s32.totalorder %s103, %s117
    %p119 = scmp.eq.s32.totalorder %s25, 0
    %p120 = por %p118, %p119
    %s122 = sadd.s32 %s121, 1
    %p125 = scmp.eq.s32.totalorder %s19, 1
    %p126 = scmp.ne.s32.totalorder %s121, %s123
    %p127 = scmp.eq.s32.totalorder %s19, 0
    %p128 = por %p126, %p127
    %p129 = scmp.ne.s32.totalorder %s121, %s123
    %p130 = scmp.eq.s32.totalorder %s24, 1
    %p131 = por %p129, %p130
    %p132 = scmp.ne.s32.totalorder %s123, %s124
    %p133 = scmp.eq.s32.totalorder %s24, 0
    %p134 = por %p132, %p133
    %p135 = scmp.ne.s32.totalorder %s123, %s124
    %p136 = scmp.eq.s32.totalorder %s25, 1
    %p137 = por %p135, %p136
    %p139 = scmp.ne.s32.totalorder %s124, %s138
    %p140 = scmp.eq.s32.totalorder %s25, 0
    %p141 = por %p139, %p140
    %s143 = sadd.s32 %s142, 1
    %p146 = scmp.eq.s32.totalorder %s19, 1
    %p147 = scmp.ne.s32.totalorder %s142, %s144
    %p148 = scmp.eq.s32.totalorder %s19, 0
    %p149 = por %p147, %p148
    %p150 = scmp.ne.s32.totalorder %s142, %s144
    %p151 = scmp.eq.s32.totalorder %s24, 1
    %p152 = por %p150, %p151
    %p153 = scmp.ne.s32.totalorder %s144, %s145
    %p154 = scmp.eq.s32.totalorder %s24, 0
    %p155 = por %p153, %p154
    %p156 = scmp.ne.s32.totalorder %s144, %s145
    %p157 = scmp.eq.s32.totalorder %s25, 1
    %p158 = por %p156, %p157
    %p160 = scmp.ne.s32.totalorder %s145, %s159
    %p161 = scmp.eq.s32.totalorder %s25, 0
    %p162 = por %p160, %p161
    %s164 = sadd.s32 %s163, 1
    %p167 = scmp.eq.s32.totalorder %s19, 1
    %p168 = scmp.ne.s32.totalorder %s163, %s165
    %p169 = scmp.eq.s32.totalorder %s19, 0
    %p170 = por %p168, %p169
    %p171 = scmp.ne.s32.totalorder %s163, %s165
    %p172 = scmp.eq.s32.totalorder %s24, 1
    %p173 = por %p171, %p172
    %p174 = scmp.ne.s32.totalorder %s165, %s166
    %p175 = scmp.eq.s32.totalorder %s24, 0
    %p176 = por %p174, %p175
    %p177 = scmp.ne.s32.totalorder %s165, %s166
    %p178 = scmp.eq.s32.totalorder %s25, 1
    %p179 = por %p177, %p178
    %p181 = scmp.ne.s32.totalorder %s166, %s180
    %p182 = scmp.eq.s32.totalorder %s25, 0
    %p183 = por %p181, %p182
    %s185 = sadd.s32 %s184, 1
    %p188 = scmp.eq.s32.totalorder %s19, 1
    %p189 = scmp.ne.s32.totalorder %s184, %s186
    %p190 = scmp.eq.s32.totalorder %s19, 0
    %p191 = por %p189, %p190
    %p192 = scmp.ne.s32.totalorder %s184, %s186
    %p193 = scmp.eq.s32.totalorder %s24, 1
    %p194 = por %p192, %p193
    %p195 = scmp.ne.s32.totalorder %s186, %s187
    %p196 = scmp.eq.s32.totalorder %s24, 0
    %p197 = por %p195, %p196
    %p198 = scmp.ne.s32.totalorder %s186, %s187
    %p199 = scmp.eq.s32.totalorder %s25, 1
    %p200 = por %p198, %p199
    %p202 = scmp.ne.s32.totalorder %s187, %s201
    %p203 = scmp.eq.s32.totalorder %s25, 0
    %p204 = por %p202, %p203
    %s206 = sadd.s32 %s205, 1
    %p209 = scmp.eq.s32.totalorder %s19, 1
    %p210 = scmp.ne.s32.totalorder %s205, %s207
    %p211 = scmp.eq.s32.totalorder %s19, 0
    %p212 = por %p210, %p211
    %p213 = scmp.ne.s32.totalorder %s205, %s207
    %p214 = scmp.eq.s32.totalorder %s24, 1
    %p215 = por %p213, %p214
    %p216 = scmp.ne.s32.totalorder %s207, %s208
    %p217 = scmp.eq.s32.totalorder %s24, 0
    %p218 = por %p216, %p217
    %p219 = scmp.ne.s32.totalorder %s207, %s208
    %p220 = scmp.eq.s32.totalorder %s25, 1
    %p221 = por %p219, %p220
    %p223 = scmp.ne.s32.totalorder %s208, %s222
    %p224 = scmp.eq.s32.totalorder %s25, 0
    %p225 = por %p223, %p224
    %s227 = sadd.s32 %s226, 1
    %p230 = scmp.eq.s32.totalorder %s19, 1
    %p231 = scmp.ne.s32.totalorder %s226, %s228
    %p232 = scmp.eq.s32.totalorder %s19, 0
    %p233 = por %p231, %p232
    %p234 = scmp.ne.s32.totalorder %s226, %s228
    %p235 = scmp.eq.s32.totalorder %s24, 1
    %p236 = por %p234, %p235
    %p237 = scmp.ne.s32.totalorder %s228, %s229
    %p238 = scmp.eq.s32.totalorder %s24, 0
    %p239 = por %p237, %p238
    %p240 = scmp.ne.s32.totalorder %s228, %s229
    %p241 = scmp.eq.s32.totalorder %s25, 1
    %p242 = por %p240, %p241
    %p244 = scmp.ne.s32.totalorder %s229, %s243
    %p245 = scmp.eq.s32.totalorder %s25, 0
    %p246 = por %p244, %p245
    %s248 = sadd.s32 %s247, 1
    %p251 = scmp.eq.s32.totalorder %s19, 1
    %p252 = scmp.ne.s32.totalorder %s247, %s249
    %p253 = scmp.eq.s32.totalorder %s19, 0
    %p254 = por %p252, %p253
    %p255 = scmp.ne.s32.totalorder %s247, %s249
    %p256 = scmp.eq.s32.totalorder %s24, 1
    %p257 = por %p255, %p256
    %p258 = scmp.ne.s32.totalorder %s249, %s250
    %p259 = scmp.eq.s32.totalorder %s24, 0
    %p260 = por %p258, %p259
    %p261 = scmp.ne.s32.totalorder %s249, %s250
    %p262 = scmp.eq.s32.totalorder %s25, 1
    %p263 = por %p261, %p262
    %p265 = scmp.ne.s32.totalorder %s250, %s264
    %p266 = scmp.eq.s32.totalorder %s25, 0
    %p267 = por %p265, %p266
    %s269 = sadd.s32 %s268, 1
    %p272 = scmp.eq.s32.totalorder %s19, 1
    %p273 = scmp.ne.s32.totalorder %s268, %s270
    %p274 = scmp.eq.s32.totalorder %s19, 0
    %p275 = por %p273, %p274
    %p276 = scmp.ne.s32.totalorder %s268, %s270
    %p277 = scmp.eq.s32.totalorder %s24, 1
    %p278 = por %p276, %p277
    %p279 = scmp.ne.s32.totalorder %s270, %s271
    %p280 = scmp.eq.s32.totalorder %s24, 0
    %p281 = por %p279, %p280
    %p282 = scmp.ne.s32.totalorder %s270, %s271
    %p283 = scmp.eq.s32.totalorder %s25, 1
    %p284 = por %p282, %p283
    %p286 = scmp.ne.s32.totalorder %s271, %s285
    %p287 = scmp.eq.s32.totalorder %s25, 0
    %p288 = por %p286, %p287
    %s290 = sadd.s32 %s289, 1
    %p293 = scmp.eq.s32.totalorder %s19, 1
    %p294 = scmp.ne.s32.totalorder %s289, %s291
    %p295 = scmp.eq.s32.totalorder %s19, 0
    %p296 = por %p294, %p295
    %p297 = scmp.ne.s32.totalorder %s289, %s291
    %p298 = scmp.eq.s32.totalorder %s24, 1
    %p299 = por %p297, %p298
    %p300 = scmp.ne.s32.totalorder %s291, %s292
    %p301 = scmp.eq.s32.totalorder %s24, 0
    %p302 = por %p300, %p301
    %p303 = scmp.ne.s32.totalorder %s291, %s292
    %p304 = scmp.eq.s32.totalorder %s25, 1
    %p305 = por %p303, %p304
    %p307 = scmp.ne.s32.totalorder %s292, %s306
    %p308 = scmp.eq.s32.totalorder %s25, 0
    %p309 = por %p307, %p308
    %s311 = sadd.s32 %s310, 1
    %p314 = scmp.eq.s32.totalorder %s19, 1
    %p315 = scmp.ne.s32.totalorder %s310, %s312
    %p316 = scmp.eq.s32.totalorder %s19, 0
    %p317 = por %p315, %p316
    %p318 = scmp.ne.s32.totalorder %s310, %s312
    %p319 = scmp.eq.s32.totalorder %s24, 1
    %p320 = por %p318, %p319
    %p321 = scmp.ne.s32.totalorder %s312, %s313
    %p322 = scmp.eq.s32.totalorder %s24, 0
    %p323 = por %p321, %p322
    %p324 = scmp.ne.s32.totalorder %s312, %s313
    %p325 = scmp.eq.s32.totalorder %s25, 1
    %p326 = por %p324, %p325
    %p328 = scmp.ne.s32.totalorder %s313, %s327
    %p329 = scmp.eq.s32.totalorder %s25, 0
    %p330 = por %p328, %p329
    %p331 = scmp.le.s32.totalorder 1, %s19
    %p332 = scmp.lt.s32.totalorder %s19, 3
    %p333 = pnand %p331, %p332
    %p334 = pneg %p333
    // Predicated region
    $region9: #{sequential_weave_graph_forward.1} parent=5 // pred_check
      _
    $region10: #{sequential_weave_graph_forward.1} parent=5 // pred_check_branch
      %336 = sbr.rel (%p333) target = $region12
    $region11: #{sequential_weave_graph_forward.1} parent=5 // pred_region
      %s337 = ssub.s32 %s19, 1
      // Predicated region
      $region13: #{sequential_weave_graph_forward.1} parent=11 // pred_check
        %p338 = pneg %p92
      $region14: #{sequential_weave_graph_forward.1} parent=11 // pred_check_branch
        %340 = sbr.rel (%p338) target = $region16
      $region15: #{sequential_weave_graph_forward.1} parent=11 // pred_region
        _
      $region16: #{sequential_weave_graph_forward.1} parent=11 // pred_fallthru
        _
      // Predicated region
      $region17: #{sequential_weave_graph_forward.1} parent=11 // pred_check
        %p341 = pneg %p113
      $region18: #{sequential_weave_graph_forward.1} parent=11 // pred_check_branch
        %343 = sbr.rel (%p341) target = $region20
      $region19: #{sequential_weave_graph_forward.1} parent=11 // pred_region
        _
      $region20: #{sequential_weave_graph_forward.1} parent=11 // pred_fallthru
        _
      // Predicated region
      $region21: #{sequential_weave_graph_forward.1} parent=11 // pred_check
        %p344 = pneg %p134
      $region22: #{sequential_weave_graph_forward.1} parent=11 // pred_check_branch
        %346 = sbr.rel (%p344) target = $region24
      $region23: #{sequential_weave_graph_forward.1} parent=11 // pred_region
        _
      $region24: #{sequential_weave_graph_forward.1} parent=11 // pred_fallthru
        _
      // Predicated region
      $region25: #{sequential_weave_graph_forward.1} parent=11 // pred_check
        %p347 = pneg %p155
      $region26: #{sequential_weave_graph_forward.1} parent=11 // pred_check_branch
        %349 = sbr.rel (%p347) target = $region28
      $region27: #{sequential_weave_graph_forward.1} parent=11 // pred_region
        _
      $region28: #{sequential_weave_graph_forward.1} parent=11 // pred_fallthru
        _
      // Predicated region
      $region29: #{sequential_weave_graph_forward.1} parent=11 // pred_check
        %p350 = pneg %p176
      $region30: #{sequential_weave_graph_forward.1} parent=11 // pred_check_branch
        %352 = sbr.rel (%p350) target = $region32
      $region31: #{sequential_weave_graph_forward.1} parent=11 // pred_region
        _
      $region32: #{sequential_weave_graph_forward.1} parent=11 // pred_fallthru
        _
      // Predicated region
      $region33: #{sequential_weave_graph_forward.1} parent=11 // pred_check
        %p353 = pneg %p197
      $region34: #{sequential_weave_graph_forward.1} parent=11 // pred_check_branch
        %355 = sbr.rel (%p353) target = $region36
      $region35: #{sequential_weave_graph_forward.1} parent=11 // pred_region
        _
      $region36: #{sequential_weave_graph_forward.1} parent=11 // pred_fallthru
        _
      // Predicated region
      $region37: #{sequential_weave_graph_forward.1} parent=11 // pred_check
        %p356 = pneg %p218
      $region38: #{sequential_weave_graph_forward.1} parent=11 // pred_check_branch
        %358 = sbr.rel (%p356) target = $region40
      $region39: #{sequential_weave_graph_forward.1} parent=11 // pred_region
        _
      $region40: #{sequential_weave_graph_forward.1} parent=11 // pred_fallthru
        _
      // Predicated region
      $region41: #{sequential_weave_graph_forward.1} parent=11 // pred_check
        %p359 = pneg %p239
      $region42: #{sequential_weave_graph_forward.1} parent=11 // pred_check_branch
        %361 = sbr.rel (%p359) target = $region44
      $region43: #{sequential_weave_graph_forward.1} parent=11 // pred_region
        _
      $region44: #{sequential_weave_graph_forward.1} parent=11 // pred_fallthru
        _
      // Predicated region
      $region45: #{sequential_weave_graph_forward.1} parent=11 // pred_check
        %p362 = pneg %p260
      $region46: #{sequential_weave_graph_forward.1} parent=11 // pred_check_branch
        %364 = sbr.rel (%p362) target = $region48
      $region47: #{sequential_weave_graph_forward.1} parent=11 // pred_region
        _
      $region48: #{sequential_weave_graph_forward.1} parent=11 // pred_fallthru
        _
      // Predicated region
      $region49: #{sequential_weave_graph_forward.1} parent=11 // pred_check
        %p365 = pneg %p281
      $region50: #{sequential_weave_graph_forward.1} parent=11 // pred_check_branch
        %367 = sbr.rel (%p365) target = $region52
      $region51: #{sequential_weave_graph_forward.1} parent=11 // pred_region
        _
      $region52: #{sequential_weave_graph_forward.1} parent=11 // pred_fallthru
        _
      // Predicated region
      $region53: #{sequential_weave_graph_forward.1} parent=11 // pred_check
        %p368 = pneg %p302
      $region54: #{sequential_weave_graph_forward.1} parent=11 // pred_check_branch
        %370 = sbr.rel (%p368) target = $region56
      $region55: #{sequential_weave_graph_forward.1} parent=11 // pred_region
        _
      $region56: #{sequential_weave_graph_forward.1} parent=11 // pred_fallthru
        _
    $region12: #{sequential_weave_graph_forward.1} parent=5 // pred_fallthru
      _
    %p371 = scmp.lt.s32.totalorder %s19, 2
    // Predicated region
    $region57: #{sequential_weave_graph_forward.1} parent=5 // pred_check
      %p372 = pneg %p371
    $region58: #{sequential_weave_graph_forward.1} parent=5 // pred_check_branch
      %374 = sbr.rel (%p372) target = $region60
    $region59: #{sequential_weave_graph_forward.1} parent=5 // pred_region
      // Predicated region
      $region61: #{sequential_weave_graph_forward.1} parent=59 // pred_check
        %p375 = pneg %p39
      $region62: #{sequential_weave_graph_forward.1} parent=59 // pred_check_branch
        %377 = sbr.rel (%p375) target = $region64
      $region63: #{sequential_weave_graph_forward.1} parent=59 // pred_region
        %s378 = smul.u32 2, %s19
        %p379 = scmp.lt.s32.totalorder %s378, 3
        %s380 = scalar_select %p379, %s378, 3
        %s381 = scalar_lea.vmem %s0, %s380
        %s382 = smul.u32 2, %s19
      $region64: #{sequential_weave_graph_forward.1} parent=59 // pred_fallthru
        _
      // Predicated region
      $region65: #{sequential_weave_graph_forward.1} parent=59 // pred_check
        %p383 = pneg %p65
      $region66: #{sequential_weave_graph_forward.1} parent=59 // pred_check_branch
        %385 = sbr.rel (%p383) target = $region68
      $region67: #{sequential_weave_graph_forward.1} parent=59 // pred_region
        %s386 = smul.u32 32, %s19
        %p387 = scmp.lt.s32.totalorder %s386, 63
        %s388 = scalar_select %p387, %s386, 63
        %s389 = smul.addr %s388, 4
        %s390 = scalar_lea.vmem %s1, %s389
        %s391 = smul.u32 32, %s19
      $region68: #{sequential_weave_graph_forward.1} parent=59 // pred_fallthru
        _
    $region60: #{sequential_weave_graph_forward.1} parent=5 // pred_fallthru
      _
    %p392 = scmp.le.s32.totalorder 1, %s19
    %p393 = scmp.lt.s32.totalorder %s19, 3
    %p394 = pnand %p392, %p393
    %p395 = pneg %p394
    // Predicated region
    $region69: #{sequential_weave_graph_forward.1} parent=5 // pred_check
      _
    $region70: #{sequential_weave_graph_forward.1} parent=5 // pred_check_branch
      %397 = sbr.rel (%p394) target = $region72
    $region71: #{sequential_weave_graph_forward.1} parent=5 // pred_region
      %s398 = ssub.s32 %s19, 1
      %s399 = smul.u32 2, %s24
      %p400 = scmp.lt.s32.totalorder %s399, 3
      %s401 = scalar_select %p400, %s399, 3
      %s402 = scalar_lea.vmem %s0, %s401
      %p403 = pneg %p45
      %p404 = pneg %p42
      %s405 = smul.u32 32, %s24
      %p406 = scmp.lt.s32.totalorder %s405, 63
      %s407 = scalar_select %p406, %s405, 63
      %s408 = smul.addr %s407, 4
      %s409 = scalar_lea.vmem %s1, %s408
      %p410 = pneg %p71
      %p411 = pneg %p68
      %p412 = pneg %p92
      %p413 = pneg %p89
      %p414 = pneg %p113
      %p415 = pneg %p110
      %p416 = pneg %p134
      %p417 = pneg %p131
      %p418 = pneg %p155
      %p419 = pneg %p152
      %p420 = pneg %p176
      %p421 = pneg %p173
      %p422 = pneg %p197
      %p423 = pneg %p194
      %p424 = pneg %p218
      %p425 = pneg %p215
      %p426 = pneg %p239
      %p427 = pneg %p236
      %p428 = pneg %p260
      %p429 = pneg %p257
      %p430 = pneg %p281
      %p431 = pneg %p278
      %p432 = pneg %p302
      %p433 = pneg %p299
      %p434 = pneg %p323
      %p435 = pneg %p320
      %s436 = smul.u32 2, %s24
      %p437 = scmp.lt.s32.totalorder %s436, 3
      %s438 = scalar_select %p437, %s436, 3
      %s439 = scalar_lea.vmem %s0, %s438
      %s440 = smul.u32 2, %s24
      %s441 = smul.u32 32, %s24
      %p442 = scmp.lt.s32.totalorder %s441, 63
      %s443 = scalar_select %p442, %s441, 63
      %s444 = smul.addr %s443, 4
      %s445 = scalar_lea.vmem %s1, %s444
      %s446 = smul.u32 32, %s24
      %v447 = vld [vmem:[%s445] sm:$0xf]
      %v448 = vld [vmem:[%s445 + $0x4] sm:$0xf]
      %v449 = vld [vmem:[%s445 + $0x8] sm:$0xf]
      %v450 = vld [vmem:[%s445 + $0xc] sm:$0xf]
      %v451 = vld [vmem:[%s445 + $0x10] sm:$0xf]
      %v452 = vld [vmem:[%s445 + $0x14] sm:$0xf]
      %v453 = vld [vmem:[%s445 + $0x18] sm:$0xf]
      %v454 = vld [vmem:[%s445 + $0x1c] sm:$0xf]
      %v455 = vld [vmem:[%s445 + $0x20] sm:$0xf]
      %v456 = vld [vmem:[%s445 + $0x24] sm:$0xf]
      %v457 = vld [vmem:[%s445 + $0x28] sm:$0xf]
      %v458 = vld [vmem:[%s445 + $0x2c] sm:$0xf]
      %v459 = vld [vmem:[%s445 + $0x30] sm:$0xf]
      %v460 = vld [vmem:[%s445 + $0x34] sm:$0xf]
      %v461 = vld [vmem:[%s445 + $0x38] sm:$0xf]
      %v462 = vld [vmem:[%s445 + $0x3c] sm:$0xf]
      %v463 = vld [vmem:[%s445 + $0x40] sm:$0xf]
      %v464 = vld [vmem:[%s445 + $0x44] sm:$0xf]
      %v465 = vld [vmem:[%s445 + $0x48] sm:$0xf]
      %v466 = vld [vmem:[%s445 + $0x4c] sm:$0xf]
      %v467 = vld [vmem:[%s445 + $0x50] sm:$0xf]
      %v468 = vld [vmem:[%s445 + $0x54] sm:$0xf]
      %v469 = vld [vmem:[%s445 + $0x58] sm:$0xf]
      %v470 = vld [vmem:[%s445 + $0x5c] sm:$0xf]
      %v471 = vld [vmem:[%s445 + $0x60] sm:$0xf]
      %v472 = vld [vmem:[%s445 + $0x64] sm:$0xf]
      %v473 = vld [vmem:[%s445 + $0x68] sm:$0xf]
      %v474 = vld [vmem:[%s445 + $0x6c] sm:$0xf]
      %v475 = vld [vmem:[%s445 + $0x70] sm:$0xf]
      %v476 = vld [vmem:[%s445 + $0x74] sm:$0xf]
      %v477 = vld [vmem:[%s445 + $0x78] sm:$0xf]
      %v478 = vld [vmem:[%s445 + $0x7c] sm:$0xf]
      %v479 = vld [vmem:[%s2] sm:$0xf]
      %v480 = vld [vmem:[%s2 + $0x4] sm:$0xf]
      %v481 = vld [vmem:[%s2 + $0x8] sm:$0xf]
      %v482 = vld [vmem:[%s2 + $0xc] sm:$0xf]
      %v483 = vld [vmem:[%s2 + $0x10] sm:$0xf]
      %v484 = vld [vmem:[%s2 + $0x14] sm:$0xf]
      %v485 = vld [vmem:[%s2 + $0x18] sm:$0xf]
      %v486 = vld [vmem:[%s2 + $0x1c] sm:$0xf]
      %v487 = vld [vmem:[%s2 + $0x20] sm:$0xf]
      %v488 = vld [vmem:[%s2 + $0x24] sm:$0xf]
      %v489 = vld [vmem:[%s2 + $0x28] sm:$0xf]
      %v490 = vld [vmem:[%s2 + $0x2c] sm:$0xf]
      %v491 = vld [vmem:[%s2 + $0x30] sm:$0xf]
      %v492 = vld [vmem:[%s2 + $0x34] sm:$0xf]
      %v493 = vld [vmem:[%s2 + $0x38] sm:$0xf]
      %v494 = vld [vmem:[%s2 + $0x3c] sm:$0xf]
      %v495 = vld [vmem:[%s3] sm:$0x1]
      %v497 = vperm.slane %v495, 0
      %v531 = vunpack.c.l.b16 %v447
      %v532 = vunpack.c.l.b16 %v448
      %v533 = vunpack.c.l.b16 %v449
      %v534 = vunpack.c.l.b16 %v450
      %v535 = vunpack.c.l.b16 %v451
      %v536 = vunpack.c.l.b16 %v452
      %v537 = vunpack.c.l.b16 %v453
      %v538 = vunpack.c.l.b16 %v454
      %v539 = vunpack.c.l.b16 %v455
      %v540 = vunpack.c.l.b16 %v456
      %v541 = vunpack.c.l.b16 %v457
      %v542 = vunpack.c.l.b16 %v458
      %v543 = vunpack.c.l.b16 %v459
      %v544 = vunpack.c.l.b16 %v460
      %v545 = vunpack.c.l.b16 %v461
      %v546 = vunpack.c.l.b16 %v462
      %v547 = vunpack.c.l.b16 %v463
      %v548 = vunpack.c.l.b16 %v464
      %v549 = vunpack.c.l.b16 %v465
      %v550 = vunpack.c.l.b16 %v466
      %v551 = vunpack.c.l.b16 %v467
      %v552 = vunpack.c.l.b16 %v468
      %v553 = vunpack.c.l.b16 %v469
      %v554 = vunpack.c.l.b16 %v470
      %v555 = vunpack.c.l.b16 %v471
      %v556 = vunpack.c.l.b16 %v472
      %v557 = vunpack.c.l.b16 %v473
      %v558 = vunpack.c.l.b16 %v474
      %v559 = vunpack.c.l.b16 %v475
      %v560 = vunpack.c.l.b16 %v476
      %v561 = vunpack.c.l.b16 %v477
      %v562 = vunpack.c.l.b16 %v478
      %v563 = vpack.c.b16 %v532, %v531
      %v564 = vpack.c.b16 %v534, %v533
      %v565 = vpack.c.b16 %v536, %v535
      %v566 = vpack.c.b16 %v538, %v537
      %v567 = vpack.c.b16 %v540, %v539
      %v568 = vpack.c.b16 %v542, %v541
      %v569 = vpack.c.b16 %v544, %v543
      %v570 = vpack.c.b16 %v546, %v545
      %v571 = vpack.c.b16 %v548, %v547
      %v572 = vpack.c.b16 %v550, %v549
      %v573 = vpack.c.b16 %v552, %v551
      %v574 = vpack.c.b16 %v554, %v553
      %v575 = vpack.c.b16 %v556, %v555
      %v576 = vpack.c.b16 %v558, %v557
      %v577 = vpack.c.b16 %v560, %v559
      %v578 = vpack.c.b16 %v562, %v561
      %v611 = vunpack.c.l.b16 %v479
      %v612 = vunpack.c.l.b16 %v480
      %v613 = vunpack.c.l.b16 %v481
      %v614 = vunpack.c.l.b16 %v482
      %v615 = vunpack.c.l.b16 %v483
      %v616 = vunpack.c.l.b16 %v484
      %v617 = vunpack.c.l.b16 %v485
      %v618 = vunpack.c.l.b16 %v486
      %v619 = vunpack.c.l.b16 %v487
      %v620 = vunpack.c.l.b16 %v488
      %v621 = vunpack.c.l.b16 %v489
      %v622 = vunpack.c.l.b16 %v490
      %v623 = vunpack.c.l.b16 %v491
      %v624 = vunpack.c.l.b16 %v492
      %v625 = vunpack.c.l.b16 %v493
      %v626 = vunpack.c.l.b16 %v494
      %v627 = vpack.c.b16 %v612, %v611
      %v628 = vpack.c.b16 %v614, %v613
      %v629 = vpack.c.b16 %v616, %v615
      %v630 = vpack.c.b16 %v618, %v617
      %v631 = vpack.c.b16 %v620, %v619
      %v632 = vpack.c.b16 %v622, %v621
      %v633 = vpack.c.b16 %v624, %v623
      %v634 = vpack.c.b16 %v626, %v625
      %643 = vmatpush.bf16.msra.mxu0 %v634
      %644 = vmatpush.bf16.msra.mxu0 %v633
      %645 = vmatpush.bf16.msra.mxu0 %v632
      %646 = vmatpush.bf16.msra.mxu0 %v631
      %647 = vmatpush.bf16.msra.mxu0 %v630
      %648 = vmatpush.bf16.msra.mxu0 %v629
      %649 = vmatpush.bf16.msra.mxu0 %v628
      %650 = vmatpush.bf16.msra.mxu0 %v627
      %651 = vmatmul.bf16.gmra.mxu0 %v563
      %v652 = vpop.f32.mrf.mxu0
      %v653 = vadd.f32 %v497, %v652
      %v654 = vpop.f32.mrf.mxu0
      %v655 = vadd.f32 %v497, %v654
      %656 = vmatmul.bf16.gmra.mxu0 %v564
      %v657 = vpop.f32.mrf.mxu0
      %v658 = vadd.f32 %v497, %v657
      %v659 = vpop.f32.mrf.mxu0
      %v660 = vadd.f32 %v497, %v659
      %661 = vmatmul.bf16.gmra.mxu0 %v565
      %v662 = vpop.f32.mrf.mxu0
      %v663 = vadd.f32 %v497, %v662
      %v664 = vpop.f32.mrf.mxu0
      %v665 = vadd.f32 %v497, %v664
      %666 = vmatmul.bf16.gmra.mxu0 %v566
      %v667 = vpop.f32.mrf.mxu0
      %v668 = vadd.f32 %v497, %v667
      %v669 = vpop.f32.mrf.mxu0
      %v670 = vadd.f32 %v497, %v669
      %671 = vmatmul.bf16.gmra.mxu0 %v567
      %v672 = vpop.f32.mrf.mxu0
      %v673 = vadd.f32 %v497, %v672
      %v674 = vpop.f32.mrf.mxu0
      %v675 = vadd.f32 %v497, %v674
      %676 = vmatmul.bf16.gmra.mxu0 %v568
      %v677 = vpop.f32.mrf.mxu0
      %v678 = vadd.f32 %v497, %v677
      %v679 = vpop.f32.mrf.mxu0
      %v680 = vadd.f32 %v497, %v679
      %681 = vmatmul.bf16.gmra.mxu0 %v569
      %v682 = vpop.f32.mrf.mxu0
      %v683 = vadd.f32 %v497, %v682
      %v684 = vpop.f32.mrf.mxu0
      %v685 = vadd.f32 %v497, %v684
      %686 = vmatmul.bf16.gmra.mxu0 %v570
      %v687 = vpop.f32.mrf.mxu0
      %v688 = vadd.f32 %v497, %v687
      %v689 = vpop.f32.mrf.mxu0
      %v690 = vadd.f32 %v497, %v689
      %691 = vmatmul.bf16.gmra.mxu0 %v571
      %v692 = vpop.f32.mrf.mxu0
      %v693 = vadd.f32 %v497, %v692
      %v694 = vpop.f32.mrf.mxu0
      %v695 = vadd.f32 %v497, %v694
      %696 = vmatmul.bf16.gmra.mxu0 %v572
      %v697 = vpop.f32.mrf.mxu0
      %v698 = vadd.f32 %v497, %v697
      %v699 = vpop.f32.mrf.mxu0
      %v700 = vadd.f32 %v497, %v699
      %701 = vmatmul.bf16.gmra.mxu0 %v573
      %v702 = vpop.f32.mrf.mxu0
      %v703 = vadd.f32 %v497, %v702
      %v704 = vpop.f32.mrf.mxu0
      %v705 = vadd.f32 %v497, %v704
      %706 = vmatmul.bf16.gmra.mxu0 %v574
      %v707 = vpop.f32.mrf.mxu0
      %v708 = vadd.f32 %v497, %v707
      %v709 = vpop.f32.mrf.mxu0
      %v710 = vadd.f32 %v497, %v709
      %711 = vmatmul.bf16.gmra.mxu0 %v575
      %v712 = vpop.f32.mrf.mxu0
      %v713 = vadd.f32 %v497, %v712
      %v714 = vpop.f32.mrf.mxu0
      %v715 = vadd.f32 %v497, %v714
      %716 = vmatmul.bf16.gmra.mxu0 %v576
      %v717 = vpop.f32.mrf.mxu0
      %v718 = vadd.f32 %v497, %v717
      %v719 = vpop.f32.mrf.mxu0
      %v720 = vadd.f32 %v497, %v719
      %721 = vmatmul.bf16.gmra.mxu0 %v577
      %v722 = vpop.f32.mrf.mxu0
      %v723 = vadd.f32 %v497, %v722
      %v724 = vpop.f32.mrf.mxu0
      %v725 = vadd.f32 %v497, %v724
      %726 = vmatmul.bf16.gmra.mxu0 %v578
      %v727 = vpop.f32.mrf.mxu0
      %v728 = vadd.f32 %v497, %v727
      %v729 = vpop.f32.mrf.mxu0
      %v730 = vadd.f32 %v497, %v729
      %731 = vdwg.mxu0
      %v732 = vmax.f32 %v653, 0.0
      %v733 = vmax.f32 %v655, 0.0
      %v734 = vmax.f32 %v658, 0.0
      %v735 = vmax.f32 %v660, 0.0
      %v736 = vmax.f32 %v663, 0.0
      %v737 = vmax.f32 %v665, 0.0
      %v738 = vmax.f32 %v668, 0.0
      %v739 = vmax.f32 %v670, 0.0
      %v740 = vmax.f32 %v673, 0.0
      %v741 = vmax.f32 %v675, 0.0
      %v742 = vmax.f32 %v678, 0.0
      %v743 = vmax.f32 %v680, 0.0
      %v744 = vmax.f32 %v683, 0.0
      %v745 = vmax.f32 %v685, 0.0
      %v746 = vmax.f32 %v688, 0.0
      %v747 = vmax.f32 %v690, 0.0
      %v748 = vmax.f32 %v693, 0.0
      %v749 = vmax.f32 %v695, 0.0
      %v750 = vmax.f32 %v698, 0.0
      %v751 = vmax.f32 %v700, 0.0
      %v752 = vmax.f32 %v703, 0.0
      %v753 = vmax.f32 %v705, 0.0
      %v754 = vmax.f32 %v708, 0.0
      %v755 = vmax.f32 %v710, 0.0
      %v756 = vmax.f32 %v713, 0.0
      %v757 = vmax.f32 %v715, 0.0
      %v758 = vmax.f32 %v718, 0.0
      %v759 = vmax.f32 %v720, 0.0
      %v760 = vmax.f32 %v723, 0.0
      %v761 = vmax.f32 %v725, 0.0
      %v762 = vmax.f32 %v728, 0.0
      %v763 = vmax.f32 %v730, 0.0
      %v764 = vld [vmem:[%s4] sm:$0x1]
      %v766 = vperm.slane %v764, 0
      %v768 = vmul.f32 %v732, %v766
      %v769 = vmul.f32 %v733, %v766
      %v770 = vmul.f32 %v734, %v766
      %v771 = vmul.f32 %v735, %v766
      %v772 = vmul.f32 %v736, %v766
      %v773 = vmul.f32 %v737, %v766
      %v774 = vmul.f32 %v738, %v766
      %v775 = vmul.f32 %v739, %v766
      %v776 = vmul.f32 %v740, %v766
      %v777 = vmul.f32 %v741, %v766
      %v778 = vmul.f32 %v742, %v766
      %v779 = vmul.f32 %v743, %v766
      %v780 = vmul.f32 %v744, %v766
      %v781 = vmul.f32 %v745, %v766
      %v782 = vmul.f32 %v746, %v766
      %v783 = vmul.f32 %v747, %v766
      %v784 = vmul.f32 %v748, %v766
      %v785 = vmul.f32 %v749, %v766
      %v786 = vmul.f32 %v750, %v766
      %v787 = vmul.f32 %v751, %v766
      %v788 = vmul.f32 %v752, %v766
      %v789 = vmul.f32 %v753, %v766
      %v790 = vmul.f32 %v754, %v766
      %v791 = vmul.f32 %v755, %v766
      %v792 = vmul.f32 %v756, %v766
      %v793 = vmul.f32 %v757, %v766
      %v794 = vmul.f32 %v758, %v766
      %v795 = vmul.f32 %v759, %v766
      %v796 = vmul.f32 %v760, %v766
      %v797 = vmul.f32 %v761, %v766
      %v798 = vmul.f32 %v762, %v766
      %v799 = vmul.f32 %v763, %v766
      %v800 = vld [vmem:[%s5] sm:$0x1]
      %v802 = vperm.slane %v800, 0
      %v804 = vadd.f32 %v768, %v802
      %v805 = vadd.f32 %v769, %v802
      %v806 = vadd.f32 %v770, %v802
      %v807 = vadd.f32 %v771, %v802
      %v808 = vadd.f32 %v772, %v802
      %v809 = vadd.f32 %v773, %v802
      %v810 = vadd.f32 %v774, %v802
      %v811 = vadd.f32 %v775, %v802
      %v812 = vadd.f32 %v776, %v802
      %v813 = vadd.f32 %v777, %v802
      %v814 = vadd.f32 %v778, %v802
      %v815 = vadd.f32 %v779, %v802
      %v816 = vadd.f32 %v780, %v802
      %v817 = vadd.f32 %v781, %v802
      %v818 = vadd.f32 %v782, %v802
      %v819 = vadd.f32 %v783, %v802
      %v820 = vadd.f32 %v784, %v802
      %v821 = vadd.f32 %v785, %v802
      %v822 = vadd.f32 %v786, %v802
      %v823 = vadd.f32 %v787, %v802
      %v824 = vadd.f32 %v788, %v802
      %v825 = vadd.f32 %v789, %v802
      %v826 = vadd.f32 %v790, %v802
      %v827 = vadd.f32 %v791, %v802
      %v828 = vadd.f32 %v792, %v802
      %v829 = vadd.f32 %v793, %v802
      %v830 = vadd.f32 %v794, %v802
      %v831 = vadd.f32 %v795, %v802
      %v832 = vadd.f32 %v796, %v802
      %v833 = vadd.f32 %v797, %v802
      %v834 = vadd.f32 %v798, %v802
      %v835 = vadd.f32 %v799, %v802
      %v836 = vpack.c.bf16 %v805, %v804
      %v837 = vpack.c.bf16 %v807, %v806
      %v838 = vpack.c.bf16 %v809, %v808
      %v839 = vpack.c.bf16 %v811, %v810
      %v840 = vpack.c.bf16 %v813, %v812
      %v841 = vpack.c.bf16 %v815, %v814
      %v842 = vpack.c.bf16 %v817, %v816
      %v843 = vpack.c.bf16 %v819, %v818
      %v844 = vpack.c.bf16 %v821, %v820
      %v845 = vpack.c.bf16 %v823, %v822
      %v846 = vpack.c.bf16 %v825, %v824
      %v847 = vpack.c.bf16 %v827, %v826
      %v848 = vpack.c.bf16 %v829, %v828
      %v849 = vpack.c.bf16 %v831, %v830
      %v850 = vpack.c.bf16 %v833, %v832
      %v851 = vpack.c.bf16 %v835, %v834
      %v852 = vld [vmem:[%s6] sm:$0xf]
      %v853 = vld [vmem:[%s6 + $0x4] sm:$0xf]
      %v854 = vld [vmem:[%s6 + $0x8] sm:$0xf]
      %v855 = vld [vmem:[%s6 + $0xc] sm:$0xf]
      %v856 = vld [vmem:[%s6 + $0x10] sm:$0xf]
      %v857 = vld [vmem:[%s6 + $0x14] sm:$0xf]
      %v858 = vld [vmem:[%s6 + $0x18] sm:$0xf]
      %v859 = vld [vmem:[%s6 + $0x1c] sm:$0xf]
      %v860 = vld [vmem:[%s6 + $0x20] sm:$0xf]
      %v861 = vld [vmem:[%s6 + $0x24] sm:$0xf]
      %v862 = vld [vmem:[%s6 + $0x28] sm:$0xf]
      %v863 = vld [vmem:[%s6 + $0x2c] sm:$0xf]
      %v864 = vld [vmem:[%s6 + $0x30] sm:$0xf]
      %v865 = vld [vmem:[%s6 + $0x34] sm:$0xf]
      %v866 = vld [vmem:[%s6 + $0x38] sm:$0xf]
      %v867 = vld [vmem:[%s6 + $0x3c] sm:$0xf]
      %v868 = vld [vmem:[%s7] sm:$0x1]
      %v870 = vperm.slane %v868, 0
      %v888 = vunpack.c.l.b16 %v852
      %v889 = vunpack.c.l.b16 %v853
      %v890 = vunpack.c.l.b16 %v854
      %v891 = vunpack.c.l.b16 %v855
      %v892 = vunpack.c.l.b16 %v856
      %v893 = vunpack.c.l.b16 %v857
      %v894 = vunpack.c.l.b16 %v858
      %v895 = vunpack.c.l.b16 %v859
      %v896 = vunpack.c.l.b16 %v860
      %v897 = vunpack.c.l.b16 %v861
      %v898 = vunpack.c.l.b16 %v862
      %v899 = vunpack.c.l.b16 %v863
      %v900 = vunpack.c.l.b16 %v864
      %v901 = vunpack.c.l.b16 %v865
      %v902 = vunpack.c.l.b16 %v866
      %v903 = vunpack.c.l.b16 %v867
      %v904 = vpack.c.b16 %v889, %v888
      %v905 = vpack.c.b16 %v891, %v890
      %v906 = vpack.c.b16 %v893, %v892
      %v907 = vpack.c.b16 %v895, %v894
      %v908 = vpack.c.b16 %v897, %v896
      %v909 = vpack.c.b16 %v899, %v898
      %v910 = vpack.c.b16 %v901, %v900
      %v911 = vpack.c.b16 %v903, %v902
      %920 = vmatpush.bf16.msra.mxu0 %v911
      %921 = vmatpush.bf16.msra.mxu0 %v910
      %922 = vmatpush.bf16.msra.mxu0 %v909
      %923 = vmatpush.bf16.msra.mxu0 %v908
      %924 = vmatpush.bf16.msra.mxu0 %v907
      %925 = vmatpush.bf16.msra.mxu0 %v906
      %926 = vmatpush.bf16.msra.mxu0 %v905
      %927 = vmatpush.bf16.msra.mxu0 %v904
      %928 = vmatmul.bf16.gmra.mxu0 %v836
      %v929 = vpop.f32.mrf.mxu0
      %v930 = vadd.f32 %v870, %v929
      %v931 = vpop.f32.mrf.mxu0
      %v932 = vadd.f32 %v870, %v931
      %933 = vmatmul.bf16.gmra.mxu0 %v837
      %v934 = vpop.f32.mrf.mxu0
      %v935 = vadd.f32 %v870, %v934
      %v936 = vpop.f32.mrf.mxu0
      %v937 = vadd.f32 %v870, %v936
      %938 = vmatmul.bf16.gmra.mxu0 %v838
      %v939 = vpop.f32.mrf.mxu0
      %v940 = vadd.f32 %v870, %v939
      %v941 = vpop.f32.mrf.mxu0
      %v942 = vadd.f32 %v870, %v941
      %943 = vmatmul.bf16.gmra.mxu0 %v839
      %v944 = vpop.f32.mrf.mxu0
      %v945 = vadd.f32 %v870, %v944
      %v946 = vpop.f32.mrf.mxu0
      %v947 = vadd.f32 %v870, %v946
      %948 = vmatmul.bf16.gmra.mxu0 %v840
      %v949 = vpop.f32.mrf.mxu0
      %v950 = vadd.f32 %v870, %v949
      %v951 = vpop.f32.mrf.mxu0
      %v952 = vadd.f32 %v870, %v951
      %953 = vmatmul.bf16.gmra.mxu0 %v841
      %v954 = vpop.f32.mrf.mxu0
      %v955 = vadd.f32 %v870, %v954
      %v956 = vpop.f32.mrf.mxu0
      %v957 = vadd.f32 %v870, %v956
      %958 = vmatmul.bf16.gmra.mxu0 %v842
      %v959 = vpop.f32.mrf.mxu0
      %v960 = vadd.f32 %v870, %v959
      %v961 = vpop.f32.mrf.mxu0
      %v962 = vadd.f32 %v870, %v961
      %963 = vmatmul.bf16.gmra.mxu0 %v843
      %v964 = vpop.f32.mrf.mxu0
      %v965 = vadd.f32 %v870, %v964
      %v966 = vpop.f32.mrf.mxu0
      %v967 = vadd.f32 %v870, %v966
      %968 = vmatmul.bf16.gmra.mxu0 %v844
      %v969 = vpop.f32.mrf.mxu0
      %v970 = vadd.f32 %v870, %v969
      %v971 = vpop.f32.mrf.mxu0
      %v972 = vadd.f32 %v870, %v971
      %973 = vmatmul.bf16.gmra.mxu0 %v845
      %v974 = vpop.f32.mrf.mxu0
      %v975 = vadd.f32 %v870, %v974
      %v976 = vpop.f32.mrf.mxu0
      %v977 = vadd.f32 %v870, %v976
      %978 = vmatmul.bf16.gmra.mxu0 %v846
      %v979 = vpop.f32.mrf.mxu0
      %v980 = vadd.f32 %v870, %v979
      %v981 = vpop.f32.mrf.mxu0
      %v982 = vadd.f32 %v870, %v981
      %983 = vmatmul.bf16.gmra.mxu0 %v847
      %v984 = vpop.f32.mrf.mxu0
      %v985 = vadd.f32 %v870, %v984
      %v986 = vpop.f32.mrf.mxu0
      %v987 = vadd.f32 %v870, %v986
      %988 = vmatmul.bf16.gmra.mxu0 %v848
      %v989 = vpop.f32.mrf.mxu0
      %v990 = vadd.f32 %v870, %v989
      %v991 = vpop.f32.mrf.mxu0
      %v992 = vadd.f32 %v870, %v991
      %993 = vmatmul.bf16.gmra.mxu0 %v849
      %v994 = vpop.f32.mrf.mxu0
      %v995 = vadd.f32 %v870, %v994
      %v996 = vpop.f32.mrf.mxu0
      %v997 = vadd.f32 %v870, %v996
      %998 = vmatmul.bf16.gmra.mxu0 %v850
      %v999 = vpop.f32.mrf.mxu0
      %v1000 = vadd.f32 %v870, %v999
      %v1001 = vpop.f32.mrf.mxu0
      %v1002 = vadd.f32 %v870, %v1001
      %1003 = vmatmul.bf16.gmra.mxu0 %v851
      %v1004 = vpop.f32.mrf.mxu0
      %v1005 = vadd.f32 %v870, %v1004
      %v1006 = vpop.f32.mrf.mxu0
      %v1007 = vadd.f32 %v870, %v1006
      %1008 = vdwg.mxu0
      %v1009 = vmax.f32 %v930, 0.0
      %v1010 = vmax.f32 %v932, 0.0
      %v1011 = vmax.f32 %v935, 0.0
      %v1012 = vmax.f32 %v937, 0.0
      %v1013 = vmax.f32 %v940, 0.0
      %v1014 = vmax.f32 %v942, 0.0
      %v1015 = vmax.f32 %v945, 0.0
      %v1016 = vmax.f32 %v947, 0.0
      %v1017 = vmax.f32 %v950, 0.0
      %v1018 = vmax.f32 %v952, 0.0
      %v1019 = vmax.f32 %v955, 0.0
      %v1020 = vmax.f32 %v957, 0.0
      %v1021 = vmax.f32 %v960, 0.0
      %v1022 = vmax.f32 %v962, 0.0
      %v1023 = vmax.f32 %v965, 0.0
      %v1024 = vmax.f32 %v967, 0.0
      %v1025 = vmax.f32 %v970, 0.0
      %v1026 = vmax.f32 %v972, 0.0
      %v1027 = vmax.f32 %v975, 0.0
      %v1028 = vmax.f32 %v977, 0.0
      %v1029 = vmax.f32 %v980, 0.0
      %v1030 = vmax.f32 %v982, 0.0
      %v1031 = vmax.f32 %v985, 0.0
      %v1032 = vmax.f32 %v987, 0.0
      %v1033 = vmax.f32 %v990, 0.0
      %v1034 = vmax.f32 %v992, 0.0
      %v1035 = vmax.f32 %v995, 0.0
      %v1036 = vmax.f32 %v997, 0.0
      %v1037 = vmax.f32 %v1000, 0.0
      %v1038 = vmax.f32 %v1002, 0.0
      %v1039 = vmax.f32 %v1005, 0.0
      %v1040 = vmax.f32 %v1007, 0.0
      %v1041 = vld [vmem:[%s8] sm:$0x1]
      %v1043 = vperm.slane %v1041, 0
      %v1045 = vmul.f32 %v1009, %v1043
      %v1046 = vmul.f32 %v1010, %v1043
      %v1047 = vmul.f32 %v1011, %v1043
      %v1048 = vmul.f32 %v1012, %v1043
      %v1049 = vmul.f32 %v1013, %v1043
      %v1050 = vmul.f32 %v1014, %v1043
      %v1051 = vmul.f32 %v1015, %v1043
      %v1052 = vmul.f32 %v1016, %v1043
      %v1053 = vmul.f32 %v1017, %v1043
      %v1054 = vmul.f32 %v1018, %v1043
      %v1055 = vmul.f32 %v1019, %v1043
      %v1056 = vmul.f32 %v1020, %v1043
      %v1057 = vmul.f32 %v1021, %v1043
      %v1058 = vmul.f32 %v1022, %v1043
      %v1059 = vmul.f32 %v1023, %v1043
      %v1060 = vmul.f32 %v1024, %v1043
      %v1061 = vmul.f32 %v1025, %v1043
      %v1062 = vmul.f32 %v1026, %v1043
      %v1063 = vmul.f32 %v1027, %v1043
      %v1064 = vmul.f32 %v1028, %v1043
      %v1065 = vmul.f32 %v1029, %v1043
      %v1066 = vmul.f32 %v1030, %v1043
      %v1067 = vmul.f32 %v1031, %v1043
      %v1068 = vmul.f32 %v1032, %v1043
      %v1069 = vmul.f32 %v1033, %v1043
      %v1070 = vmul.f32 %v1034, %v1043
      %v1071 = vmul.f32 %v1035, %v1043
      %v1072 = vmul.f32 %v1036, %v1043
      %v1073 = vmul.f32 %v1037, %v1043
      %v1074 = vmul.f32 %v1038, %v1043
      %v1075 = vmul.f32 %v1039, %v1043
      %v1076 = vmul.f32 %v1040, %v1043
      %v1077 = vld [vmem:[%s9] sm:$0x1]
      %v1079 = vperm.slane %v1077, 0
      %v1081 = vadd.f32 %v1045, %v1079
      %v1082 = vadd.f32 %v1046, %v1079
      %v1083 = vadd.f32 %v1047, %v1079
      %v1084 = vadd.f32 %v1048, %v1079
      %v1085 = vadd.f32 %v1049, %v1079
      %v1086 = vadd.f32 %v1050, %v1079
      %v1087 = vadd.f32 %v1051, %v1079
      %v1088 = vadd.f32 %v1052, %v1079
      %v1089 = vadd.f32 %v1053, %v1079
      %v1090 = vadd.f32 %v1054, %v1079
      %v1091 = vadd.f32 %v1055, %v1079
      %v1092 = vadd.f32 %v1056, %v1079
      %v1093 = vadd.f32 %v1057, %v1079
      %v1094 = vadd.f32 %v1058, %v1079
      %v1095 = vadd.f32 %v1059, %v1079
      %v1096 = vadd.f32 %v1060, %v1079
      %v1097 = vadd.f32 %v1061, %v1079
      %v1098 = vadd.f32 %v1062, %v1079
      %v1099 = vadd.f32 %v1063, %v1079
      %v1100 = vadd.f32 %v1064, %v1079
      %v1101 = vadd.f32 %v1065, %v1079
      %v1102 = vadd.f32 %v1066, %v1079
      %v1103 = vadd.f32 %v1067, %v1079
      %v1104 = vadd.f32 %v1068, %v1079
      %v1105 = vadd.f32 %v1069, %v1079
      %v1106 = vadd.f32 %v1070, %v1079
      %v1107 = vadd.f32 %v1071, %v1079
      %v1108 = vadd.f32 %v1072, %v1079
      %v1109 = vadd.f32 %v1073, %v1079
      %v1110 = vadd.f32 %v1074, %v1079
      %v1111 = vadd.f32 %v1075, %v1079
      %v1112 = vadd.f32 %v1076, %v1079
      %v1113 = vpack.c.bf16 %v1082, %v1081
      %v1114 = vpack.c.bf16 %v1084, %v1083
      %v1115 = vpack.c.bf16 %v1086, %v1085
      %v1116 = vpack.c.bf16 %v1088, %v1087
      %v1117 = vpack.c.bf16 %v1090, %v1089
      %v1118 = vpack.c.bf16 %v1092, %v1091
      %v1119 = vpack.c.bf16 %v1094, %v1093
      %v1120 = vpack.c.bf16 %v1096, %v1095
      %v1121 = vpack.c.bf16 %v1098, %v1097
      %v1122 = vpack.c.bf16 %v1100, %v1099
      %v1123 = vpack.c.bf16 %v1102, %v1101
      %v1124 = vpack.c.bf16 %v1104, %v1103
      %v1125 = vpack.c.bf16 %v1106, %v1105
      %v1126 = vpack.c.bf16 %v1108, %v1107
      %v1127 = vpack.c.bf16 %v1110, %v1109
      %v1128 = vpack.c.bf16 %v1112, %v1111
      %v1129 = vld [vmem:[%s10] sm:$0xf]
      %v1130 = vld [vmem:[%s10 + $0x4] sm:$0xf]
      %v1131 = vld [vmem:[%s10 + $0x8] sm:$0xf]
      %v1132 = vld [vmem:[%s10 + $0xc] sm:$0xf]
      %v1133 = vld [vmem:[%s10 + $0x10] sm:$0xf]
      %v1134 = vld [vmem:[%s10 + $0x14] sm:$0xf]
      %v1135 = vld [vmem:[%s10 + $0x18] sm:$0xf]
      %v1136 = vld [vmem:[%s10 + $0x1c] sm:$0xf]
      %v1137 = vld [vmem:[%s10 + $0x20] sm:$0xf]
      %v1138 = vld [vmem:[%s10 + $0x24] sm:$0xf]
      %v1139 = vld [vmem:[%s10 + $0x28] sm:$0xf]
      %v1140 = vld [vmem:[%s10 + $0x2c] sm:$0xf]
      %v1141 = vld [vmem:[%s10 + $0x30] sm:$0xf]
      %v1142 = vld [vmem:[%s10 + $0x34] sm:$0xf]
      %v1143 = vld [vmem:[%s10 + $0x38] sm:$0xf]
      %v1144 = vld [vmem:[%s10 + $0x3c] sm:$0xf]
      %v1145 = vld [vmem:[%s11] sm:$0x1]
      %v1147 = vperm.slane %v1145, 0
      %v1165 = vunpack.c.l.b16 %v1129
      %v1166 = vunpack.c.l.b16 %v1130
      %v1167 = vunpack.c.l.b16 %v1131
      %v1168 = vunpack.c.l.b16 %v1132
      %v1169 = vunpack.c.l.b16 %v1133
      %v1170 = vunpack.c.l.b16 %v1134
      %v1171 = vunpack.c.l.b16 %v1135
      %v1172 = vunpack.c.l.b16 %v1136
      %v1173 = vunpack.c.l.b16 %v1137
      %v1174 = vunpack.c.l.b16 %v1138
      %v1175 = vunpack.c.l.b16 %v1139
      %v1176 = vunpack.c.l.b16 %v1140
      %v1177 = vunpack.c.l.b16 %v1141
      %v1178 = vunpack.c.l.b16 %v1142
      %v1179 = vunpack.c.l.b16 %v1143
      %v1180 = vunpack.c.l.b16 %v1144
      %v1181 = vpack.c.b16 %v1166, %v1165
      %v1182 = vpack.c.b16 %v1168, %v1167
      %v1183 = vpack.c.b16 %v1170, %v1169
      %v1184 = vpack.c.b16 %v1172, %v1171
      %v1185 = vpack.c.b16 %v1174, %v1173
      %v1186 = vpack.c.b16 %v1176, %v1175
      %v1187 = vpack.c.b16 %v1178, %v1177
      %v1188 = vpack.c.b16 %v1180, %v1179
      %1197 = vmatpush.bf16.msra.mxu0 %v1188
      %1198 = vmatpush.bf16.msra.mxu0 %v1187
      %1199 = vmatpush.bf16.msra.mxu0 %v1186
      %1200 = vmatpush.bf16.msra.mxu0 %v1185
      %1201 = vmatpush.bf16.msra.mxu0 %v1184
      %1202 = vmatpush.bf16.msra.mxu0 %v1183
      %1203 = vmatpush.bf16.msra.mxu0 %v1182
      %1204 = vmatpush.bf16.msra.mxu0 %v1181
      %1205 = vmatmul.bf16.gmra.mxu0 %v1113
      %v1206 = vpop.f32.mrf.mxu0
      %v1207 = vadd.f32 %v1147, %v1206
      %v1208 = vpop.f32.mrf.mxu0
      %v1209 = vadd.f32 %v1147, %v1208
      %1210 = vmatmul.bf16.gmra.mxu0 %v1114
      %v1211 = vpop.f32.mrf.mxu0
      %v1212 = vadd.f32 %v1147, %v1211
      %v1213 = vpop.f32.mrf.mxu0
      %v1214 = vadd.f32 %v1147, %v1213
      %1215 = vmatmul.bf16.gmra.mxu0 %v1115
      %v1216 = vpop.f32.mrf.mxu0
      %v1217 = vadd.f32 %v1147, %v1216
      %v1218 = vpop.f32.mrf.mxu0
      %v1219 = vadd.f32 %v1147, %v1218
      %1220 = vmatmul.bf16.gmra.mxu0 %v1116
      %v1221 = vpop.f32.mrf.mxu0
      %v1222 = vadd.f32 %v1147, %v1221
      %v1223 = vpop.f32.mrf.mxu0
      %v1224 = vadd.f32 %v1147, %v1223
      %1225 = vmatmul.bf16.gmra.mxu0 %v1117
      %v1226 = vpop.f32.mrf.mxu0
      %v1227 = vadd.f32 %v1147, %v1226
      %v1228 = vpop.f32.mrf.mxu0
      %v1229 = vadd.f32 %v1147, %v1228
      %1230 = vmatmul.bf16.gmra.mxu0 %v1118
      %v1231 = vpop.f32.mrf.mxu0
      %v1232 = vadd.f32 %v1147, %v1231
      %v1233 = vpop.f32.mrf.mxu0
      %v1234 = vadd.f32 %v1147, %v1233
      %1235 = vmatmul.bf16.gmra.mxu0 %v1119
      %v1236 = vpop.f32.mrf.mxu0
      %v1237 = vadd.f32 %v1147, %v1236
      %v1238 = vpop.f32.mrf.mxu0
      %v1239 = vadd.f32 %v1147, %v1238
      %1240 = vmatmul.bf16.gmra.mxu0 %v1120
      %v1241 = vpop.f32.mrf.mxu0
      %v1242 = vadd.f32 %v1147, %v1241
      %v1243 = vpop.f32.mrf.mxu0
      %v1244 = vadd.f32 %v1147, %v1243
      %1245 = vmatmul.bf16.gmra.mxu0 %v1121
      %v1246 = vpop.f32.mrf.mxu0
      %v1247 = vadd.f32 %v1147, %v1246
      %v1248 = vpop.f32.mrf.mxu0
      %v1249 = vadd.f32 %v1147, %v1248
      %1250 = vmatmul.bf16.gmra.mxu0 %v1122
      %v1251 = vpop.f32.mrf.mxu0
      %v1252 = vadd.f32 %v1147, %v1251
      %v1253 = vpop.f32.mrf.mxu0
      %v1254 = vadd.f32 %v1147, %v1253
      %1255 = vmatmul.bf16.gmra.mxu0 %v1123
      %v1256 = vpop.f32.mrf.mxu0
      %v1257 = vadd.f32 %v1147, %v1256
      %v1258 = vpop.f32.mrf.mxu0
      %v1259 = vadd.f32 %v1147, %v1258
      %1260 = vmatmul.bf16.gmra.mxu0 %v1124
      %v1261 = vpop.f32.mrf.mxu0
      %v1262 = vadd.f32 %v1147, %v1261
      %v1263 = vpop.f32.mrf.mxu0
      %v1264 = vadd.f32 %v1147, %v1263
      %1265 = vmatmul.bf16.gmra.mxu0 %v1125
      %v1266 = vpop.f32.mrf.mxu0
      %v1267 = vadd.f32 %v1147, %v1266
      %v1268 = vpop.f32.mrf.mxu0
      %v1269 = vadd.f32 %v1147, %v1268
      %1270 = vmatmul.bf16.gmra.mxu0 %v1126
      %v1271 = vpop.f32.mrf.mxu0
      %v1272 = vadd.f32 %v1147, %v1271
      %v1273 = vpop.f32.mrf.mxu0
      %v1274 = vadd.f32 %v1147, %v1273
      %1275 = vmatmul.bf16.gmra.mxu0 %v1127
      %v1276 = vpop.f32.mrf.mxu0
      %v1277 = vadd.f32 %v1147, %v1276
      %v1278 = vpop.f32.mrf.mxu0
      %v1279 = vadd.f32 %v1147, %v1278
      %1280 = vmatmul.bf16.gmra.mxu0 %v1128
      %v1281 = vpop.f32.mrf.mxu0
      %v1282 = vadd.f32 %v1147, %v1281
      %v1283 = vpop.f32.mrf.mxu0
      %v1284 = vadd.f32 %v1147, %v1283
      %1285 = vdwg.mxu0
      %p1286 = scmp.eq.s32.totalorder %s24, 0
      // Predicated region
      $region73: #{sequential_weave_graph_forward.1} parent=71 // pred_check
        %p1287 = pneg %p1286
      $region74: #{sequential_weave_graph_forward.1} parent=71 // pred_check_branch
        %1289 = sbr.rel (%p1287) target = $region76
      $region75: #{sequential_weave_graph_forward.1} parent=71 // pred_region
        %1290 = vst [vmem:[%s13] sm:$0xff] 0.0
      $region76: #{sequential_weave_graph_forward.1} parent=71 // pred_fallthru
        _
      %v1291 = vld [vmem:[%s439] sm:$0x3]
      %v1292 = vlaneseq
      %v1293 = vshrl.u32 %v1292, 7
      %v1294 = vperm.slane %v1291, 0
      %v1295 = vperm.slane %v1291, 1
      %vm1296 = vcmp.eq.s32.totalorder %v1293, %v1294
      %vm1297 = vcmp.eq.s32.totalorder %v1293, %v1295
      %v1298 = vsel %vm1296, 1, 0
      %v1299 = vsel %vm1297, 1, 0
      %v1300 = vcvt.s32.f32 %v1298
      %v1301 = vcvt.s32.f32 %v1299
      %v1302 = vpack.c.bf16 %v1300, %v1300
      %v1303 = vpack.c.bf16 %v1301, %v1301
      %v1304 = vld [vmem:[%s13] sm:$0xff]
      %v1305 = vpack.c.bf16 %v1209, %v1207
      %v1306 = vpack.c.bf16 %v1214, %v1212
      %v1307 = vpack.c.bf16 %v1219, %v1217
      %v1308 = vpack.c.bf16 %v1224, %v1222
      %v1309 = vpack.c.bf16 %v1229, %v1227
      %v1310 = vpack.c.bf16 %v1234, %v1232
      %v1311 = vpack.c.bf16 %v1239, %v1237
      %v1312 = vpack.c.bf16 %v1244, %v1242
      %v1313 = vpack.c.bf16 %v1249, %v1247
      %v1314 = vpack.c.bf16 %v1254, %v1252
      %v1315 = vpack.c.bf16 %v1259, %v1257
      %v1316 = vpack.c.bf16 %v1264, %v1262
      %v1317 = vpack.c.bf16 %v1269, %v1267
      %v1318 = vpack.c.bf16 %v1274, %v1272
      %v1319 = vpack.c.bf16 %v1279, %v1277
      %v1320 = vpack.c.bf16 %v1284, %v1282
      %1321 = vmatpush.bf16.msra.mxu0 %v1312
      %1322 = vmatpush.bf16.msra.mxu0 %v1311
      %1323 = vmatpush.bf16.msra.mxu0 %v1310
      %1324 = vmatpush.bf16.msra.mxu0 %v1309
      %1325 = vmatpush.bf16.msra.mxu0 %v1308
      %1326 = vmatpush.bf16.msra.mxu0 %v1307
      %1327 = vmatpush.bf16.msra.mxu0 %v1306
      %1328 = vmatpush.bf16.msra.mxu0 %v1305
      %1329 = vmatmul.bf16.gmra.mxu0 %v1302
      %v1330 = vpop.f32.mrf.mxu0
      %v1331 = vadd.f32 0.0, %v1330
      %v1332 = vpop.f32.mrf.mxu0
      %1333 = vdwg.mxu0
      %1334 = vmatpush.bf16.msra.mxu0 %v1320
      %1335 = vmatpush.bf16.msra.mxu0 %v1319
      %1336 = vmatpush.bf16.msra.mxu0 %v1318
      %1337 = vmatpush.bf16.msra.mxu0 %v1317
      %1338 = vmatpush.bf16.msra.mxu0 %v1316
      %1339 = vmatpush.bf16.msra.mxu0 %v1315
      %1340 = vmatpush.bf16.msra.mxu0 %v1314
      %1341 = vmatpush.bf16.msra.mxu0 %v1313
      %1342 = vmatmul.bf16.gmra.mxu0 %v1303
      %v1343 = vpop.f32.mrf.mxu0
      %v1344 = vadd.f32 %v1331, %v1343
      %v1345 = vpop.f32.mrf.mxu0
      %1346 = vdwg.mxu0
      %v1347 = vadd.f32 %v1304, %v1344
      %1348 = vst [vmem:[%s13] sm:$0xff] %v1347
      %p1349 = scmp.eq.s32.totalorder %s24, 1
      // Predicated region
      $region77: #{sequential_weave_graph_forward.1} parent=71 // pred_check
        %p1350 = pneg %p1349
      $region78: #{sequential_weave_graph_forward.1} parent=71 // pred_check_branch
        %1352 = sbr.rel (%p1350) target = $region80
      $region79: #{sequential_weave_graph_forward.1} parent=71 // pred_region
        %v1353 = vld [vmem:[%s13] sm:$0xff]
        %v1354 = vld [vmem:[%s12] sm:$0xff]
        %1356 = vset.pattern.permute.xlu0 0
        %1357 = vperm.xlu0 %1356, %v1354
        %v1358 = vpop.permute.xlu0 %1357
        %v1360 = vmul.f32 %v1353, %v1358
        %1361 = vst [vmem:[%s13] sm:$0xff] %v1360
      $region80: #{sequential_weave_graph_forward.1} parent=71 // pred_fallthru
        _
      // Predicated region
      $region81: #{sequential_weave_graph_forward.1} parent=71 // pred_check
        %p1362 = pneg %p320
      $region82: #{sequential_weave_graph_forward.1} parent=71 // pred_check_branch
        %1364 = sbr.rel (%p1362) target = $region84
      $region83: #{sequential_weave_graph_forward.1} parent=71 // pred_region
        _
      $region84: #{sequential_weave_graph_forward.1} parent=71 // pred_fallthru
        _
      // Predicated region
      $region85: #{sequential_weave_graph_forward.1} parent=71 // pred_check
        %p1365 = pneg %p320
      $region86: #{sequential_weave_graph_forward.1} parent=71 // pred_check_branch
        %1367 = sbr.rel (%p1365) target = $region88
      $region87: #{sequential_weave_graph_forward.1} parent=71 // pred_region
        _
      $region88: #{sequential_weave_graph_forward.1} parent=71 // pred_fallthru
        _
    $region72: #{sequential_weave_graph_forward.1} parent=5 // pred_fallthru
      _
    %p1368 = scmp.le.s32.totalorder 2, %s19
    // Predicated region
    $region89: #{sequential_weave_graph_forward.1} parent=5 // pred_check
      %p1369 = pneg %p1368
    $region90: #{sequential_weave_graph_forward.1} parent=5 // pred_check_branch
      %1371 = sbr.rel (%p1369) target = $region92
    $region91: #{sequential_weave_graph_forward.1} parent=5 // pred_region
      %s1372 = ssub.s32 %s19, 2
    $region92: #{sequential_weave_graph_forward.1} parent=5 // pred_fallthru
      _
  $region6: #{sequential_weave_graph_forward.1} parent=0 // loop_footer
    %s23 = sadd.s32 1, %s19
  $region7: #{sequential_weave_graph_forward.1} parent=0 // loop_footer_branch
    %18 = sbr.rel target = $region3
  $region8: #{sequential_weave_graph_forward.1} parent=0 // loop_exit
    _

</llo_original>
